<compile_context>
chip_gen: v7x
topology: tpu7x:2x2x1
jax: 0.10.0
libtpu: 0.0.40
codegen_flags: <defaults>
</compile_context>

<pallas_src>
import jax
import jax.numpy as jnp
from jax.experimental import pallas as pl
from jax.experimental.pallas import tpu as pltpu

FC1_OUT = 60          # nn.Linear(16*13*nclass, 60)
N_NODES = 16 * 13     # node count hard-coded by fc1's input size


def gcn_kernel(xT_ref, adjT_ref, w1T_ref, b1_ref, w2T_ref, b2_ref,
               wfc1_ref, bfc1_ref, wfc2_ref, bfc2_ref, out_ref):
    # One graph per grid step.  Feature-major: lane dim == N_pad everywhere.
    xT = xT_ref[0]                              # (nfeat, Np) f32
    adjT = adjT_ref[0].astype(jnp.float32)      # (Np, Np)  == adj^T (zero padded)

    # GraphConvolution 1:  h1 = relu(adj @ (x @ W1) + b1)     (transposed)
    s1T = jnp.dot(w1T_ref[...], xT, preferred_element_type=jnp.float32)     # (nhid, Np)
    h1T = jnp.dot(s1T, adjT, preferred_element_type=jnp.float32) + b1_ref[...]
    h1T = jnp.maximum(h1T, 0.0)                                             # (nhid, Np)

    # GraphConvolution 2:  h2 = relu(adj @ (h1 @ W2) + b2)    (transposed)
    s2T = jnp.dot(w2T_ref[...], h1T, preferred_element_type=jnp.float32)    # (nclass, Np)
    h2T = jnp.dot(s2T, adjT, preferred_element_type=jnp.float32) + b2_ref[...]
    h2T = jnp.maximum(h2T, 0.0)                                             # (nclass, Np)

    # fc1: out1[k] = sum_{n,c} Wfc1[k, n*nclass + c] * h2[n, c] + bfc1[k]
    # wfc1_ref[c, n, k] == Wfc1[k, n*nclass + c] (zero for padded n), so this is
    # nclass tiny lane-dense (1,Np)@(Np,60) matvecs, statically unrolled.
    hfc = bfc1_ref[...]                                                     # (1, 60)
    for c in range(h2T.shape[0]):
        hfc = hfc + jnp.dot(h2T[c:c + 1, :], wfc1_ref[c],
                            preferred_element_type=jnp.float32)
    hfc = jnp.maximum(hfc, 0.0)

    # fc2 (VPU mul + lane reduce) + sigmoid (exp on EUP, approx reciprocal)
    y = jnp.sum(hfc * wfc2_ref[...], axis=1, keepdims=True) + bfc2_ref[...]  # (1, 1)
    out_ref[0] = pl.reciprocal(1.0 + jnp.exp(-y), approx=True)


@jax.jit
def gcn_forward(x, adj, w1, b1, w2, b2, wfc1, bfc1, wfc2, bfc2):
    """x:(B,N,nfeat)|(N,nfeat), adj:(B,N,N)|(N,N); PyTorch-layout fc weights."""
    squeeze = x.ndim == 2
    if squeeze:
        x, adj = x[None], adj[None]
    B, N, nfeat = x.shape
    nhid, nclass = w1.shape[1], w2.shape[1]
    assert N == N_NODES, "module hard-codes 16*13 nodes via fc1's input size"
    Np = ((N + 127) // 128) * 128          # 208 -> 256: exact 128-lane tiles
    pad_n = Np - N

    # Feature-major + zero-padded operands; adj (the dominant DMA) stored bf16.
    xT = jnp.pad(jnp.swapaxes(x, 1, 2), ((0, 0), (0, 0), (0, pad_n)))      # (B,nfeat,Np) f32
    adjT = jnp.pad(jnp.swapaxes(adj, 1, 2),
                   ((0, 0), (0, pad_n), (0, pad_n))).astype(jnp.bfloat16)  # (B,Np,Np) bf16
    w1T = jnp.transpose(w1)                                                # (nhid, nfeat)
    b1c = b1.reshape(nhid, 1)
    w2T = jnp.transpose(w2)                                                # (nclass, nhid)
    b2c = b2.reshape(nclass, 1)
    # Wfc1[k, n*nclass + c] -> wfc1_k[c, n, k], zero-padded along n.
    wfc1_k = jnp.transpose(wfc1.reshape(FC1_OUT, N, nclass), (2, 1, 0))
    wfc1_k = jnp.pad(wfc1_k, ((0, 0), (0, pad_n), (0, 0)))                 # (nclass, Np, 60)
    bfc1_r = bfc1.reshape(1, FC1_OUT)
    wfc2_r = wfc2.reshape(1, FC1_OUT)
    bfc2_r = bfc2.reshape(1, 1)

    def whole(shape):
        return pl.BlockSpec(shape, lambda b: (0,) * len(shape))

    operands = (xT, adjT, w1T, b1c, w2T, b2c, wfc1_k, bfc1_r, wfc2_r, bfc2_r)
    flops = 2 * B * (nhid * nfeat * Np + nhid * Np * Np + nclass * nhid * Np
                     + nclass * Np * Np + nclass * Np * FC1_OUT + FC1_OUT)
    bytes_accessed = int(sum(a.size * a.dtype.itemsize for a in operands) + 4 * B)

    out = pl.pallas_call(
        gcn_kernel,
        out_shape=jax.ShapeDtypeStruct((B, 1, 1), jnp.float32),
        grid=(B,),
        in_specs=[
            pl.BlockSpec((1, nfeat, Np), lambda b: (b, 0, 0)),   # xT  (per graph)
            pl.BlockSpec((1, Np, Np), lambda b: (b, 0, 0)),      # adjT (per graph)
            whole((nhid, nfeat)),                                # w1T
            whole((nhid, 1)),                                    # b1
            whole((nclass, nhid)),                               # w2T
            whole((nclass, 1)),                                  # b2
            whole((nclass, Np, FC1_OUT)),                        # wfc1
            whole((1, FC1_OUT)),                                 # bfc1
            whole((1, FC1_OUT)),                                 # wfc2
            whole((1, 1)),                                       # bfc2
        ],
        out_specs=pl.BlockSpec((1, 1, 1), lambda b: (b, 0, 0)),
        compiler_params=pltpu.CompilerParams(
            dimension_semantics=("parallel",)),
        cost_estimate=pl.CostEstimate(flops=flops, transcendentals=2 * B,
                                      bytes_accessed=bytes_accessed),
    )(*operands)

    out = out.reshape(B)
    return out[0] if squeeze else out


if __name__ == "__main__":
    B = 2
    N, nfeat, nhid, nclass = N_NODES, 8, 32, 4

    key = jax.random.PRNGKey(0)
    (k_x, k_adj, k_w1, k_b1, k_w2, k_b2,
     k_wfc1, k_bfc1, k_wfc2, k_bfc2) = jax.random.split(key, 10)

    x = jax.random.normal(k_x, (B, N, nfeat), dtype=jnp.float32)
    adj_raw = jax.random.uniform(k_adj, (B, N, N), dtype=jnp.float32)
    adj = adj_raw / jnp.sum(adj_raw, axis=-1, keepdims=True)   # row-normalized

    def uinit(k, shape, fan_in):
        bound = 1.0 / jnp.sqrt(jnp.float32(fan_in))
        return jax.random.uniform(k, shape, jnp.float32, -bound, bound)

    w1 = uinit(k_w1, (nfeat, nhid), nfeat)
    b1 = uinit(k_b1, (nhid,), nfeat)
    w2 = uinit(k_w2, (nhid, nclass), nhid)
    b2 = uinit(k_b2, (nclass,), nhid)
    wfc1 = uinit(k_wfc1, (FC1_OUT, N * nclass), N * nclass)
    bfc1 = uinit(k_bfc1, (FC1_OUT,), N * nclass)
    wfc2 = uinit(k_wfc2, (1, FC1_OUT), FC1_OUT)
    bfc2 = uinit(k_bfc2, (1,), FC1_OUT)

    out = gcn_forward(x, adj, w1, b1, w2, b2, wfc1, bfc1, wfc2, bfc2)
    jax.block_until_ready(out)

    # Plain-JAX reference using the same bf16-rounded adjacency the kernel sees.
    adj_q = adj.astype(jnp.bfloat16).astype(jnp.float32)

    def ref_one(xg, ag):
        h1 = jnp.maximum(ag @ (xg @ w1) + b1, 0.0)
        h2 = jnp.maximum(ag @ (h1 @ w2) + b2, 0.0)
        hfc = jnp.maximum(wfc1 @ h2.reshape(-1) + bfc1, 0.0)
        y = wfc2 @ hfc + bfc2
        return jax.nn.sigmoid(y[0])

    ref = jax.vmap(ref_one)(x, adj_q)
    # tolerance covers MXU accumulation order + approx EUP reciprocal in sigmoid
    assert jnp.allclose(out, ref, atol=5e-3, rtol=5e-3), (out, ref)
    print("KERNEL_OK")
</pallas_src>

<mosaic_0001>
module attributes {stable_mosaic.version = 11 : i64} {
  func.func @gcn_kernel(%arg0: i32, %arg1: memref<1x8x256xf32, #tpu.memory_space<vmem>>, %arg2: memref<1x256x256xbf16, #tpu.memory_space<vmem>>, %arg3: memref<32x8xf32, #tpu.memory_space<vmem>>, %arg4: memref<32x1xf32, #tpu.memory_space<vmem>>, %arg5: memref<4x32xf32, #tpu.memory_space<vmem>>, %arg6: memref<4x1xf32, #tpu.memory_space<vmem>>, %arg7: memref<4x256x60xf32, #tpu.memory_space<vmem>>, %arg8: memref<1x60xf32, #tpu.memory_space<vmem>>, %arg9: memref<1x60xf32, #tpu.memory_space<vmem>>, %arg10: memref<1x1xf32, #tpu.memory_space<vmem>>, %arg11: memref<1x1x1xf32, #tpu.memory_space<vmem>>) attributes {dimension_semantics = [#tpu.dimension_semantics<parallel>], iteration_bounds = array<i64: 2>, scalar_prefetch = 0 : i64, scratch_operands = 0 : i64, tpu.core_type = #tpu.core_type<tc>, window_params = [{transform_indices = @transform_0, window_bounds = array<i64: 1, 8, 256>}, {transform_indices = @transform_1, window_bounds = array<i64: 1, 256, 256>}, {pipeline_mode = #tpu.pipeline_mode<synchronous>, transform_indices = @transform_2, window_bounds = array<i64: 32, 8>}, {pipeline_mode = #tpu.pipeline_mode<synchronous>, transform_indices = @transform_3, window_bounds = array<i64: 32, 1>}, {pipeline_mode = #tpu.pipeline_mode<synchronous>, transform_indices = @transform_4, window_bounds = array<i64: 4, 32>}, {pipeline_mode = #tpu.pipeline_mode<synchronous>, transform_indices = @transform_5, window_bounds = array<i64: 4, 1>}, {pipeline_mode = #tpu.pipeline_mode<synchronous>, transform_indices = @transform_6, window_bounds = array<i64: 4, 256, 60>}, {pipeline_mode = #tpu.pipeline_mode<synchronous>, transform_indices = @transform_7, window_bounds = array<i64: 1, 60>}, {pipeline_mode = #tpu.pipeline_mode<synchronous>, transform_indices = @transform_8, window_bounds = array<i64: 1, 60>}, {pipeline_mode = #tpu.pipeline_mode<synchronous>, transform_indices = @transform_9, window_bounds = array<i64: 1, 1>}, {transform_indices = @transform_10, window_bounds = array<i64: 1, 1, 1>}]} {
    %c0 = arith.constant 0 : index
    %c0_0 = arith.constant 0 : index
    %c0_1 = arith.constant 0 : index
    %0 = vector.load %arg1[%c0, %c0_0, %c0_1] : memref<1x8x256xf32, #tpu.memory_space<vmem>>, vector<1x8x256xf32>
    %1 = vector.shape_cast %0 : vector<1x8x256xf32> to vector<8x256xf32>
    %c0_2 = arith.constant 0 : index
    %c0_3 = arith.constant 0 : index
    %c0_4 = arith.constant 0 : index
    %2 = vector.load %arg2[%c0_2, %c0_3, %c0_4] : memref<1x256x256xbf16, #tpu.memory_space<vmem>>, vector<1x256x256xbf16>
    %3 = vector.shape_cast %2 : vector<1x256x256xbf16> to vector<256x256xbf16>
    %4 = arith.extf %3 : vector<256x256xbf16> to vector<256x256xf32>
    %c0_5 = arith.constant 0 : index
    %c0_6 = arith.constant 0 : index
    %5 = vector.load %arg3[%c0_5, %c0_6] : memref<32x8xf32, #tpu.memory_space<vmem>>, vector<32x8xf32>
    %cst = arith.constant dense<0.000000e+00> : vector<32x256xf32>
    %6 = tpu.matmul %5, %1, %cst {dimension_numbers = #tpu.dot_dimension_numbers<[1], [0], [0], [1], [0, 0, 1, 1], [], []>} : vector<32x8xf32>, vector<8x256xf32>, vector<32x256xf32> -> vector<32x256xf32>
    %cst_7 = arith.constant dense<0.000000e+00> : vector<32x256xf32>
    %7 = tpu.matmul %6, %4, %cst_7 {dimension_numbers = #tpu.dot_dimension_numbers<[1], [0], [0], [1], [0, 0, 1, 1], [], []>} : vector<32x256xf32>, vector<256x256xf32>, vector<32x256xf32> -> vector<32x256xf32>
    %c0_8 = arith.constant 0 : index
    %c0_9 = arith.constant 0 : index
    %8 = vector.load %arg4[%c0_8, %c0_9] : memref<32x1xf32, #tpu.memory_space<vmem>>, vector<32x1xf32>
    %9 = vector.broadcast %8 : vector<32x1xf32> to vector<32x256xf32>
    %10 = arith.addf %7, %9 : vector<32x256xf32>
    %cst_10 = arith.constant 0.000000e+00 : f32
    %11 = vector.broadcast %cst_10 : f32 to vector<32x256xf32>
    %12 = arith.maximumf %10, %11 : vector<32x256xf32>
    %c0_11 = arith.constant 0 : index
    %c0_12 = arith.constant 0 : index
    %13 = vector.load %arg5[%c0_11, %c0_12] : memref<4x32xf32, #tpu.memory_space<vmem>>, vector<4x32xf32>
    %cst_13 = arith.constant dense<0.000000e+00> : vector<4x256xf32>
    %14 = tpu.matmul %13, %12, %cst_13 {dimension_numbers = #tpu.dot_dimension_numbers<[1], [0], [0], [1], [0, 0, 1, 1], [], []>} : vector<4x32xf32>, vector<32x256xf32>, vector<4x256xf32> -> vector<4x256xf32>
    %cst_14 = arith.constant dense<0.000000e+00> : vector<4x256xf32>
    %15 = tpu.matmul %14, %4, %cst_14 {dimension_numbers = #tpu.dot_dimension_numbers<[1], [0], [0], [1], [0, 0, 1, 1], [], []>} : vector<4x256xf32>, vector<256x256xf32>, vector<4x256xf32> -> vector<4x256xf32>
    %c0_15 = arith.constant 0 : index
    %c0_16 = arith.constant 0 : index
    %16 = vector.load %arg6[%c0_15, %c0_16] : memref<4x1xf32, #tpu.memory_space<vmem>>, vector<4x1xf32>
    %17 = vector.broadcast %16 : vector<4x1xf32> to vector<4x256xf32>
    %18 = arith.addf %15, %17 : vector<4x256xf32>
    %cst_17 = arith.constant 0.000000e+00 : f32
    %19 = vector.broadcast %cst_17 : f32 to vector<4x256xf32>
    %20 = arith.maximumf %18, %19 : vector<4x256xf32>
    %c0_18 = arith.constant 0 : index
    %c0_19 = arith.constant 0 : index
    %21 = vector.load %arg8[%c0_18, %c0_19] : memref<1x60xf32, #tpu.memory_space<vmem>>, vector<1x60xf32>
    %22 = vector.extract_strided_slice %20 {offsets = [0, 0], sizes = [1, 256], strides = [1, 1]} : vector<4x256xf32> to vector<1x256xf32>
    %c0_20 = arith.constant 0 : index
    %c0_21 = arith.constant 0 : index
    %c0_22 = arith.constant 0 : index
    %23 = vector.load %arg7[%c0_20, %c0_21, %c0_22] : memref<4x256x60xf32, #tpu.memory_space<vmem>>, vector<1x256x60xf32>
    %24 = vector.shape_cast %23 : vector<1x256x60xf32> to vector<256x60xf32>
    %cst_23 = arith.constant dense<0.000000e+00> : vector<1x60xf32>
    %25 = tpu.matmul %22, %24, %cst_23 {dimension_numbers = #tpu.dot_dimension_numbers<[1], [0], [0], [1], [0, 0, 1, 1], [], []>} : vector<1x256xf32>, vector<256x60xf32>, vector<1x60xf32> -> vector<1x60xf32>
    %26 = arith.addf %21, %25 : vector<1x60xf32>
    %27 = vector.extract_strided_slice %20 {offsets = [1, 0], sizes = [1, 256], strides = [1, 1]} : vector<4x256xf32> to vector<1x256xf32>
    %c1 = arith.constant 1 : index
    %c0_24 = arith.constant 0 : index
    %c0_25 = arith.constant 0 : index
    %28 = vector.load %arg7[%c1, %c0_24, %c0_25] : memref<4x256x60xf32, #tpu.memory_space<vmem>>, vector<1x256x60xf32>
    %29 = vector.shape_cast %28 : vector<1x256x60xf32> to vector<256x60xf32>
    %cst_26 = arith.constant dense<0.000000e+00> : vector<1x60xf32>
    %30 = tpu.matmul %27, %29, %cst_26 {dimension_numbers = #tpu.dot_dimension_numbers<[1], [0], [0], [1], [0, 0, 1, 1], [], []>} : vector<1x256xf32>, vector<256x60xf32>, vector<1x60xf32> -> vector<1x60xf32>
    %31 = arith.addf %26, %30 : vector<1x60xf32>
    %32 = vector.extract_strided_slice %20 {offsets = [2, 0], sizes = [1, 256], strides = [1, 1]} : vector<4x256xf32> to vector<1x256xf32>
    %c2 = arith.constant 2 : index
    %c0_27 = arith.constant 0 : index
    %c0_28 = arith.constant 0 : index
    %33 = vector.load %arg7[%c2, %c0_27, %c0_28] : memref<4x256x60xf32, #tpu.memory_space<vmem>>, vector<1x256x60xf32>
    %34 = vector.shape_cast %33 : vector<1x256x60xf32> to vector<256x60xf32>
    %cst_29 = arith.constant dense<0.000000e+00> : vector<1x60xf32>
    %35 = tpu.matmul %32, %34, %cst_29 {dimension_numbers = #tpu.dot_dimension_numbers<[1], [0], [0], [1], [0, 0, 1, 1], [], []>} : vector<1x256xf32>, vector<256x60xf32>, vector<1x60xf32> -> vector<1x60xf32>
    %36 = arith.addf %31, %35 : vector<1x60xf32>
    %37 = vector.extract_strided_slice %20 {offsets = [3, 0], sizes = [1, 256], strides = [1, 1]} : vector<4x256xf32> to vector<1x256xf32>
    %c3 = arith.constant 3 : index
    %c0_30 = arith.constant 0 : index
    %c0_31 = arith.constant 0 : index
    %38 = vector.load %arg7[%c3, %c0_30, %c0_31] : memref<4x256x60xf32, #tpu.memory_space<vmem>>, vector<1x256x60xf32>
    %39 = vector.shape_cast %38 : vector<1x256x60xf32> to vector<256x60xf32>
    %cst_32 = arith.constant dense<0.000000e+00> : vector<1x60xf32>
    %40 = tpu.matmul %37, %39, %cst_32 {dimension_numbers = #tpu.dot_dimension_numbers<[1], [0], [0], [1], [0, 0, 1, 1], [], []>} : vector<1x256xf32>, vector<256x60xf32>, vector<1x60xf32> -> vector<1x60xf32>
    %41 = arith.addf %36, %40 : vector<1x60xf32>
    %cst_33 = arith.constant 0.000000e+00 : f32
    %42 = vector.broadcast %cst_33 : f32 to vector<1x60xf32>
    %43 = arith.maximumf %41, %42 : vector<1x60xf32>
    %c0_34 = arith.constant 0 : index
    %c0_35 = arith.constant 0 : index
    %44 = vector.load %arg9[%c0_34, %c0_35] : memref<1x60xf32, #tpu.memory_space<vmem>>, vector<1x60xf32>
    %45 = arith.mulf %43, %44 : vector<1x60xf32>
    %cst_36 = arith.constant dense<0.000000e+00> : vector<1xf32>
    %46 = vector.multi_reduction <add>, %45, %cst_36 [1] : vector<1x60xf32> to vector<1xf32>
    %47 = vector.shape_cast %46 : vector<1xf32> to vector<1x1xf32>
    %c0_37 = arith.constant 0 : index
    %c0_38 = arith.constant 0 : index
    %48 = vector.load %arg10[%c0_37, %c0_38] : memref<1x1xf32, #tpu.memory_space<vmem>>, vector<1x1xf32>
    %49 = arith.addf %47, %48 : vector<1x1xf32>
    %cst_39 = arith.constant 0.000000e+00 : f32
    %50 = vector.broadcast %cst_39 : f32 to vector<1x1xf32>
    %51 = arith.subf %50, %49 : vector<1x1xf32>
    %52 = math.exp %51 : vector<1x1xf32>
    %cst_40 = arith.constant 1.000000e+00 : f32
    %53 = vector.broadcast %cst_40 : f32 to vector<1x1xf32>
    %54 = arith.addf %53, %52 : vector<1x1xf32>
    %55 = tpu.reciprocal %54 {approx = true} : vector<1x1xf32> -> vector<1x1xf32>
    %c0_41 = arith.constant 0 : index
    %c0_42 = arith.constant 0 : index
    %c0_43 = arith.constant 0 : index
    %56 = vector.load %arg11[%c0_41, %c0_42, %c0_43] : memref<1x1x1xf32, #tpu.memory_space<vmem>>, vector<1x1x1xf32>
    %57 = vector.shape_cast %56 : vector<1x1x1xf32> to vector<1x1xf32>
    %58 = vector.shape_cast %55 : vector<1x1xf32> to vector<1x1x1xf32>
    tpu.vector_store %arg11[%c0_41, %c0_42, %c0_43], %58 {strides = array<i32>} : memref<1x1x1xf32, #tpu.memory_space<vmem>>, vector<1x1x1xf32>,
    return
  }
  func.func @transform_0(%arg0: i32) -> (i32, i32, i32) {
    %c0_i32 = arith.constant 0 : i32
    %c0_i32_0 = arith.constant 0 : i32
    %c0_i32_1 = arith.constant 0 : i32
    return %arg0, %c0_i32, %c0_i32_0 : i32, i32, i32
  }
  func.func @transform_1(%arg0: i32) -> (i32, i32, i32) {
    %c0_i32 = arith.constant 0 : i32
    %c0_i32_0 = arith.constant 0 : i32
    %c0_i32_1 = arith.constant 0 : i32
    return %arg0, %c0_i32, %c0_i32_0 : i32, i32, i32
  }
  func.func @transform_2(%arg0: i32) -> (i32, i32) {
    %c0_i32 = arith.constant 0 : i32
    %c0_i32_0 = arith.constant 0 : i32
    %c0_i32_1 = arith.constant 0 : i32
    return %c0_i32, %c0_i32_0 : i32, i32
  }
  func.func @transform_3(%arg0: i32) -> (i32, i32) {
    %c0_i32 = arith.constant 0 : i32
    %c0_i32_0 = arith.constant 0 : i32
    %c0_i32_1 = arith.constant 0 : i32
    return %c0_i32, %c0_i32_0 : i32, i32
  }
  func.func @transform_4(%arg0: i32) -> (i32, i32) {
    %c0_i32 = arith.constant 0 : i32
    %c0_i32_0 = arith.constant 0 : i32
    %c0_i32_1 = arith.constant 0 : i32
    return %c0_i32, %c0_i32_0 : i32, i32
  }
  func.func @transform_5(%arg0: i32) -> (i32, i32) {
    %c0_i32 = arith.constant 0 : i32
    %c0_i32_0 = arith.constant 0 : i32
    %c0_i32_1 = arith.constant 0 : i32
    return %c0_i32, %c0_i32_0 : i32, i32
  }
  func.func @transform_6(%arg0: i32) -> (i32, i32, i32) {
    %c0_i32 = arith.constant 0 : i32
    %c0_i32_0 = arith.constant 0 : i32
    %c0_i32_1 = arith.constant 0 : i32
    %c0_i32_2 = arith.constant 0 : i32
    return %c0_i32, %c0_i32_0, %c0_i32_1 : i32, i32, i32
  }
  func.func @transform_7(%arg0: i32) -> (i32, i32) {
    %c0_i32 = arith.constant 0 : i32
    %c0_i32_0 = arith.constant 0 : i32
    %c0_i32_1 = arith.constant 0 : i32
    return %c0_i32, %c0_i32_0 : i32, i32
  }
  func.func @transform_8(%arg0: i32) -> (i32, i32) {
    %c0_i32 = arith.constant 0 : i32
    %c0_i32_0 = arith.constant 0 : i32
    %c0_i32_1 = arith.constant 0 : i32
    return %c0_i32, %c0_i32_0 : i32, i32
  }
  func.func @transform_9(%arg0: i32) -> (i32, i32) {
    %c0_i32 = arith.constant 0 : i32
    %c0_i32_0 = arith.constant 0 : i32
    %c0_i32_1 = arith.constant 0 : i32
    return %c0_i32, %c0_i32_0 : i32, i32
  }
  func.func @transform_10(%arg0: i32) -> (i32, i32, i32) {
    %c0_i32 = arith.constant 0 : i32
    %c0_i32_0 = arith.constant 0 : i32
    %c0_i32_1 = arith.constant 0 : i32
    return %arg0, %c0_i32, %c0_i32_0 : i32, i32, i32
  }
}

</mosaic_0001>

<llo_original>
// kernel: gcn_forward.1
$region0: #{gcn_forward.1}
  #allocation0 [shape = 'u32[]', space=smem, size = 0x4, offset = 0x4, fixed_abs, tag = 'smem constant byte address 0x4 - core index']
  #allocation1 [shape = 'u32[144,128]{1,0:T(1,128)}', space=vmem, size = 0x12000, scoped, tag = 'internal scratch']
  #allocation2 [shape = 'f32[1,1]{1,0:T(1,128)S(1)}', space=vmem, size = 0x200, scoped, tag = 'scoped memory for gcn_forward.1']
  %s0 = inlined_call_operand.vmem [shape: f32[2,8,256], index: 0, kind: input, shape index: {}]
  %s1 = inlined_call_operand.vmem [shape: bf16[2,256,256], index: 1, kind: input, shape index: {}]
  %s2 = inlined_call_operand.vmem [shape: f32[32,8], index: 2, kind: input, shape index: {}]
  %s3 = inlined_call_operand.vmem [shape: f32[32,1], index: 3, kind: input, shape index: {}]
  %s4 = inlined_call_operand.vmem [shape: f32[4,32], index: 4, kind: input, shape index: {}]
  %s5 = inlined_call_operand.vmem [shape: f32[4,1], index: 5, kind: input, shape index: {}]
  %s6 = inlined_call_operand.vmem [shape: f32[4,256,60], index: 6, kind: input, shape index: {}]
  %s7 = inlined_call_operand.vmem [shape: f32[1,60], index: 7, kind: input, shape index: {}]
  %s8 = inlined_call_operand.vmem [shape: f32[1,60], index: 8, kind: input, shape index: {}]
  %s9 = inlined_call_operand.<no memory space> [shape: f32[1,1], index: 9, kind: input, shape index: {}]
  %s10 = inlined_call_operand.vmem [shape: f32[2,1,1], index: 10, kind: output, shape index: {}]
  %s11 = sld [smem:[#allocation0]]
  $region73: #{gcn_forward.1} parent=0
    _
  %s13 = ssub.s32 1, %s11
  %s14 = scalar_select 0, %s13, %s11
  %v15 = vstv %s9
  %16 = vst [vmem:[#allocation2] sm:$0x1] %v15
  loop: start=0, step=1, limit=4
  $region2: #{gcn_forward.1} parent=0 // loop_pre_header
    _
  $region3: #{gcn_forward.1} parent=0 // loop_header
    %s18 = sphi 0, %s22
    %p19 = scmp.ge.s32.totalorder %s18, 4
    %s28 = sphi 0, %s30
    %s31 = sphi 0, %s28
    %s32 = sphi 0, %s31
    %s48 = sphi 0, %s32
    %s54 = sphi 0, %s56
    %s57 = sphi 0, %s54
    %s58 = sphi 0, %s57
    %s74 = sphi 0, %s58
    %s78 = sphi 0, %s78
    %s80 = sphi 0, %s78
    %s81 = sphi 0, %s80
    %s95 = sphi 0, %s81
    %s99 = sphi 0, %s99
    %s101 = sphi 0, %s99
    %s102 = sphi 0, %s101
    %s116 = sphi 0, %s102
    %s120 = sphi 0, %s120
    %s122 = sphi 0, %s120
    %s123 = sphi 0, %s122
    %s137 = sphi 0, %s123
    %s141 = sphi 0, %s141
    %s143 = sphi 0, %s141
    %s144 = sphi 0, %s143
    %s158 = sphi 0, %s144
    %s162 = sphi 0, %s162
    %s164 = sphi 0, %s162
    %s165 = sphi 0, %s164
    %s179 = sphi 0, %s165
    %s183 = sphi 0, %s183
    %s185 = sphi 0, %s183
    %s186 = sphi 0, %s185
    %s200 = sphi 0, %s186
    %s204 = sphi 0, %s204
    %s206 = sphi 0, %s204
    %s207 = sphi 0, %s206
    %s221 = sphi 0, %s207
    %s225 = sphi 0, %s225
    %s227 = sphi 0, %s225
    %s228 = sphi 0, %s227
    %s242 = sphi 0, %s228
    %s248 = sphi 0, %s250
    %s251 = sphi 0, %s248
    %s252 = sphi 0, %s251
    %s268 = sphi 0, %s252
  $region4: #{gcn_forward.1} parent=0 // loop_header_branch
    %21 = sbr.rel (%p19) target = $region8
  $region5: #{gcn_forward.1} parent=0 // loop_body
    %s23 = ssub.s32 %s18, 1
    %s24 = ssub.s32 %s18, 2
    %s25 = sadd.s32 %s18, 1
    %s26 = ssub.s32 %s18, %s25
    %p27 = scmp.eq.s32.totalorder %s26, 0
    %s29 = sadd.s32 %s28, 1
    %s30 = scalar_select %p27, %s28, %s29
    %p33 = pneg %p27
    %p34 = scmp.eq.s32.totalorder %s18, 1
    %p35 = por %p33, %p34
    %p36 = scmp.ne.s32.totalorder %s28, %s31
    %p37 = scmp.eq.s32.totalorder %s18, 0
    %p38 = por %p36, %p37
    %p39 = scmp.ne.s32.totalorder %s28, %s31
    %p40 = scmp.eq.s32.totalorder %s23, 1
    %p41 = por %p39, %p40
    %p42 = scmp.ne.s32.totalorder %s31, %s32
    %p43 = scmp.eq.s32.totalorder %s23, 0
    %p44 = por %p42, %p43
    %p45 = scmp.ne.s32.totalorder %s31, %s32
    %p46 = scmp.eq.s32.totalorder %s24, 1
    %p47 = por %p45, %p46
    %p49 = scmp.ne.s32.totalorder %s32, %s48
    %p50 = scmp.eq.s32.totalorder %s24, 0
    %p51 = por %p49, %p50
    %s52 = ssub.s32 %s18, %s25
    %p53 = scmp.eq.s32.totalorder %s52, 0
    %s55 = sadd.s32 %s54, 1
    %s56 = scalar_select %p53, %s54, %s55
    %p59 = pneg %p53
    %p60 = scmp.eq.s32.totalorder %s18, 1
    %p61 = por %p59, %p60
    %p62 = scmp.ne.s32.totalorder %s54, %s57
    %p63 = scmp.eq.s32.totalorder %s18, 0
    %p64 = por %p62, %p63
    %p65 = scmp.ne.s32.totalorder %s54, %s57
    %p66 = scmp.eq.s32.totalorder %s23, 1
    %p67 = por %p65, %p66
    %p68 = scmp.ne.s32.totalorder %s57, %s58
    %p69 = scmp.eq.s32.totalorder %s23, 0
    %p70 = por %p68, %p69
    %p71 = scmp.ne.s32.totalorder %s57, %s58
    %p72 = scmp.eq.s32.totalorder %s24, 1
    %p73 = por %p71, %p72
    %p75 = scmp.ne.s32.totalorder %s58, %s74
    %p76 = scmp.eq.s32.totalorder %s24, 0
    %p77 = por %p75, %p76
    %s79 = sadd.s32 %s78, 1
    %p82 = scmp.eq.s32.totalorder %s18, 1
    %p83 = scmp.ne.s32.totalorder %s78, %s80
    %p84 = scmp.eq.s32.totalorder %s18, 0
    %p85 = por %p83, %p84
    %p86 = scmp.ne.s32.totalorder %s78, %s80
    %p87 = scmp.eq.s32.totalorder %s23, 1
    %p88 = por %p86, %p87
    %p89 = scmp.ne.s32.totalorder %s80, %s81
    %p90 = scmp.eq.s32.totalorder %s23, 0
    %p91 = por %p89, %p90
    %p92 = scmp.ne.s32.totalorder %s80, %s81
    %p93 = scmp.eq.s32.totalorder %s24, 1
    %p94 = por %p92, %p93
    %p96 = scmp.ne.s32.totalorder %s81, %s95
    %p97 = scmp.eq.s32.totalorder %s24, 0
    %p98 = por %p96, %p97
    %s100 = sadd.s32 %s99, 1
    %p103 = scmp.eq.s32.totalorder %s18, 1
    %p104 = scmp.ne.s32.totalorder %s99, %s101
    %p105 = scmp.eq.s32.totalorder %s18, 0
    %p106 = por %p104, %p105
    %p107 = scmp.ne.s32.totalorder %s99, %s101
    %p108 = scmp.eq.s32.totalorder %s23, 1
    %p109 = por %p107, %p108
    %p110 = scmp.ne.s32.totalorder %s101, %s102
    %p111 = scmp.eq.s32.totalorder %s23, 0
    %p112 = por %p110, %p111
    %p113 = scmp.ne.s32.totalorder %s101, %s102
    %p114 = scmp.eq.s32.totalorder %s24, 1
    %p115 = por %p113, %p114
    %p117 = scmp.ne.s32.totalorder %s102, %s116
    %p118 = scmp.eq.s32.totalorder %s24, 0
    %p119 = por %p117, %p118
    %s121 = sadd.s32 %s120, 1
    %p124 = scmp.eq.s32.totalorder %s18, 1
    %p125 = scmp.ne.s32.totalorder %s120, %s122
    %p126 = scmp.eq.s32.totalorder %s18, 0
    %p127 = por %p125, %p126
    %p128 = scmp.ne.s32.totalorder %s120, %s122
    %p129 = scmp.eq.s32.totalorder %s23, 1
    %p130 = por %p128, %p129
    %p131 = scmp.ne.s32.totalorder %s122, %s123
    %p132 = scmp.eq.s32.totalorder %s23, 0
    %p133 = por %p131, %p132
    %p134 = scmp.ne.s32.totalorder %s122, %s123
    %p135 = scmp.eq.s32.totalorder %s24, 1
    %p136 = por %p134, %p135
    %p138 = scmp.ne.s32.totalorder %s123, %s137
    %p139 = scmp.eq.s32.totalorder %s24, 0
    %p140 = por %p138, %p139
    %s142 = sadd.s32 %s141, 1
    %p145 = scmp.eq.s32.totalorder %s18, 1
    %p146 = scmp.ne.s32.totalorder %s141, %s143
    %p147 = scmp.eq.s32.totalorder %s18, 0
    %p148 = por %p146, %p147
    %p149 = scmp.ne.s32.totalorder %s141, %s143
    %p150 = scmp.eq.s32.totalorder %s23, 1
    %p151 = por %p149, %p150
    %p152 = scmp.ne.s32.totalorder %s143, %s144
    %p153 = scmp.eq.s32.totalorder %s23, 0
    %p154 = por %p152, %p153
    %p155 = scmp.ne.s32.totalorder %s143, %s144
    %p156 = scmp.eq.s32.totalorder %s24, 1
    %p157 = por %p155, %p156
    %p159 = scmp.ne.s32.totalorder %s144, %s158
    %p160 = scmp.eq.s32.totalorder %s24, 0
    %p161 = por %p159, %p160
    %s163 = sadd.s32 %s162, 1
    %p166 = scmp.eq.s32.totalorder %s18, 1
    %p167 = scmp.ne.s32.totalorder %s162, %s164
    %p168 = scmp.eq.s32.totalorder %s18, 0
    %p169 = por %p167, %p168
    %p170 = scmp.ne.s32.totalorder %s162, %s164
    %p171 = scmp.eq.s32.totalorder %s23, 1
    %p172 = por %p170, %p171
    %p173 = scmp.ne.s32.totalorder %s164, %s165
    %p174 = scmp.eq.s32.totalorder %s23, 0
    %p175 = por %p173, %p174
    %p176 = scmp.ne.s32.totalorder %s164, %s165
    %p177 = scmp.eq.s32.totalorder %s24, 1
    %p178 = por %p176, %p177
    %p180 = scmp.ne.s32.totalorder %s165, %s179
    %p181 = scmp.eq.s32.totalorder %s24, 0
    %p182 = por %p180, %p181
    %s184 = sadd.s32 %s183, 1
    %p187 = scmp.eq.s32.totalorder %s18, 1
    %p188 = scmp.ne.s32.totalorder %s183, %s185
    %p189 = scmp.eq.s32.totalorder %s18, 0
    %p190 = por %p188, %p189
    %p191 = scmp.ne.s32.totalorder %s183, %s185
    %p192 = scmp.eq.s32.totalorder %s23, 1
    %p193 = por %p191, %p192
    %p194 = scmp.ne.s32.totalorder %s185, %s186
    %p195 = scmp.eq.s32.totalorder %s23, 0
    %p196 = por %p194, %p195
    %p197 = scmp.ne.s32.totalorder %s185, %s186
    %p198 = scmp.eq.s32.totalorder %s24, 1
    %p199 = por %p197, %p198
    %p201 = scmp.ne.s32.totalorder %s186, %s200
    %p202 = scmp.eq.s32.totalorder %s24, 0
    %p203 = por %p201, %p202
    %s205 = sadd.s32 %s204, 1
    %p208 = scmp.eq.s32.totalorder %s18, 1
    %p209 = scmp.ne.s32.totalorder %s204, %s206
    %p210 = scmp.eq.s32.totalorder %s18, 0
    %p211 = por %p209, %p210
    %p212 = scmp.ne.s32.totalorder %s204, %s206
    %p213 = scmp.eq.s32.totalorder %s23, 1
    %p214 = por %p212, %p213
    %p215 = scmp.ne.s32.totalorder %s206, %s207
    %p216 = scmp.eq.s32.totalorder %s23, 0
    %p217 = por %p215, %p216
    %p218 = scmp.ne.s32.totalorder %s206, %s207
    %p219 = scmp.eq.s32.totalorder %s24, 1
    %p220 = por %p218, %p219
    %p222 = scmp.ne.s32.totalorder %s207, %s221
    %p223 = scmp.eq.s32.totalorder %s24, 0
    %p224 = por %p222, %p223
    %s226 = sadd.s32 %s225, 1
    %p229 = scmp.eq.s32.totalorder %s18, 1
    %p230 = scmp.ne.s32.totalorder %s225, %s227
    %p231 = scmp.eq.s32.totalorder %s18, 0
    %p232 = por %p230, %p231
    %p233 = scmp.ne.s32.totalorder %s225, %s227
    %p234 = scmp.eq.s32.totalorder %s23, 1
    %p235 = por %p233, %p234
    %p236 = scmp.ne.s32.totalorder %s227, %s228
    %p237 = scmp.eq.s32.totalorder %s23, 0
    %p238 = por %p236, %p237
    %p239 = scmp.ne.s32.totalorder %s227, %s228
    %p240 = scmp.eq.s32.totalorder %s24, 1
    %p241 = por %p239, %p240
    %p243 = scmp.ne.s32.totalorder %s228, %s242
    %p244 = scmp.eq.s32.totalorder %s24, 0
    %p245 = por %p243, %p244
    %s246 = ssub.s32 %s18, %s25
    %p247 = scmp.eq.s32.totalorder %s246, 0
    %s249 = sadd.s32 %s248, 1
    %s250 = scalar_select %p247, %s248, %s249
    %p253 = pneg %p247
    %p254 = scmp.eq.s32.totalorder %s18, 1
    %p255 = por %p253, %p254
    %p256 = scmp.ne.s32.totalorder %s248, %s251
    %p257 = scmp.eq.s32.totalorder %s18, 0
    %p258 = por %p256, %p257
    %p259 = scmp.ne.s32.totalorder %s248, %s251
    %p260 = scmp.eq.s32.totalorder %s23, 1
    %p261 = por %p259, %p260
    %p262 = scmp.ne.s32.totalorder %s251, %s252
    %p263 = scmp.eq.s32.totalorder %s23, 0
    %p264 = por %p262, %p263
    %p265 = scmp.ne.s32.totalorder %s251, %s252
    %p266 = scmp.eq.s32.totalorder %s24, 1
    %p267 = por %p265, %p266
    %p269 = scmp.ne.s32.totalorder %s252, %s268
    %p270 = scmp.eq.s32.totalorder %s24, 0
    %p271 = por %p269, %p270
    %p272 = scmp.le.s32.totalorder 1, %s18
    %p273 = scmp.lt.s32.totalorder %s18, 3
    %p274 = pnand %p272, %p273
    %p275 = pneg %p274
    // Predicated region
    $region9: #{gcn_forward.1} parent=5 // pred_check
      _
    $region10: #{gcn_forward.1} parent=5 // pred_check_branch
      %277 = sbr.rel (%p274) target = $region12
    $region11: #{gcn_forward.1} parent=5 // pred_region
      %s278 = ssub.s32 %s18, 1
      // Predicated region
      $region13: #{gcn_forward.1} parent=11 // pred_check
        %p279 = pneg %p91
      $region14: #{gcn_forward.1} parent=11 // pred_check_branch
        %281 = sbr.rel (%p279) target = $region16
      $region15: #{gcn_forward.1} parent=11 // pred_region
        _
      $region16: #{gcn_forward.1} parent=11 // pred_fallthru
        _
      // Predicated region
      $region17: #{gcn_forward.1} parent=11 // pred_check
        %p282 = pneg %p112
      $region18: #{gcn_forward.1} parent=11 // pred_check_branch
        %284 = sbr.rel (%p282) target = $region20
      $region19: #{gcn_forward.1} parent=11 // pred_region
        _
      $region20: #{gcn_forward.1} parent=11 // pred_fallthru
        _
      // Predicated region
      $region21: #{gcn_forward.1} parent=11 // pred_check
        %p285 = pneg %p133
      $region22: #{gcn_forward.1} parent=11 // pred_check_branch
        %287 = sbr.rel (%p285) target = $region24
      $region23: #{gcn_forward.1} parent=11 // pred_region
        _
      $region24: #{gcn_forward.1} parent=11 // pred_fallthru
        _
      // Predicated region
      $region25: #{gcn_forward.1} parent=11 // pred_check
        %p288 = pneg %p154
      $region26: #{gcn_forward.1} parent=11 // pred_check_branch
        %290 = sbr.rel (%p288) target = $region28
      $region27: #{gcn_forward.1} parent=11 // pred_region
        _
      $region28: #{gcn_forward.1} parent=11 // pred_fallthru
        _
      // Predicated region
      $region29: #{gcn_forward.1} parent=11 // pred_check
        %p291 = pneg %p175
      $region30: #{gcn_forward.1} parent=11 // pred_check_branch
        %293 = sbr.rel (%p291) target = $region32
      $region31: #{gcn_forward.1} parent=11 // pred_region
        _
      $region32: #{gcn_forward.1} parent=11 // pred_fallthru
        _
      // Predicated region
      $region33: #{gcn_forward.1} parent=11 // pred_check
        %p294 = pneg %p196
      $region34: #{gcn_forward.1} parent=11 // pred_check_branch
        %296 = sbr.rel (%p294) target = $region36
      $region35: #{gcn_forward.1} parent=11 // pred_region
        _
      $region36: #{gcn_forward.1} parent=11 // pred_fallthru
        _
      // Predicated region
      $region37: #{gcn_forward.1} parent=11 // pred_check
        %p297 = pneg %p217
      $region38: #{gcn_forward.1} parent=11 // pred_check_branch
        %299 = sbr.rel (%p297) target = $region40
      $region39: #{gcn_forward.1} parent=11 // pred_region
        _
      $region40: #{gcn_forward.1} parent=11 // pred_fallthru
        _
      // Predicated region
      $region41: #{gcn_forward.1} parent=11 // pred_check
        %p300 = pneg %p238
      $region42: #{gcn_forward.1} parent=11 // pred_check_branch
        %302 = sbr.rel (%p300) target = $region44
      $region43: #{gcn_forward.1} parent=11 // pred_region
        _
      $region44: #{gcn_forward.1} parent=11 // pred_fallthru
        _
    $region12: #{gcn_forward.1} parent=5 // pred_fallthru
      _
    %p303 = scmp.lt.s32.totalorder %s18, 2
    // Predicated region
    $region45: #{gcn_forward.1} parent=5 // pred_check
      %p304 = pneg %p303
    $region46: #{gcn_forward.1} parent=5 // pred_check_branch
      %306 = sbr.rel (%p304) target = $region48
    $region47: #{gcn_forward.1} parent=5 // pred_region
      // Predicated region
      $region49: #{gcn_forward.1} parent=47 // pred_check
        %p307 = pneg %p38
      $region50: #{gcn_forward.1} parent=47 // pred_check_branch
        %309 = sbr.rel (%p307) target = $region52
      $region51: #{gcn_forward.1} parent=47 // pred_region
        %p310 = scmp.lt.s32.totalorder %s18, 1
        %s311 = scalar_select %p310, %s18, 1
        %s312 = smul.addr %s311, 2
        %s313 = smul.addr %s312, 8
        %s314 = scalar_lea.vmem %s0, %s313
      $region52: #{gcn_forward.1} parent=47 // pred_fallthru
        _
      // Predicated region
      $region53: #{gcn_forward.1} parent=47 // pred_check
        %p315 = pneg %p64
      $region54: #{gcn_forward.1} parent=47 // pred_check_branch
        %317 = sbr.rel (%p315) target = $region56
      $region55: #{gcn_forward.1} parent=47 // pred_region
        %p318 = scmp.lt.s32.totalorder %s18, 1
        %s319 = scalar_select %p318, %s18, 1
        %s320 = smul.addr %s319, 64
        %s321 = smul.addr %s320, 4
        %s322 = scalar_lea.vmem %s1, %s321
      $region56: #{gcn_forward.1} parent=47 // pred_fallthru
        _
    $region48: #{gcn_forward.1} parent=5 // pred_fallthru
      _
    %p323 = scmp.le.s32.totalorder 1, %s18
    %p324 = scmp.lt.s32.totalorder %s18, 3
    %p325 = pnand %p323, %p324
    %p326 = pneg %p325
    // Predicated region
    $region57: #{gcn_forward.1} parent=5 // pred_check
      _
    $region58: #{gcn_forward.1} parent=5 // pred_check_branch
      %328 = sbr.rel (%p325) target = $region60
    $region59: #{gcn_forward.1} parent=5 // pred_region
      %s329 = ssub.s32 %s18, 1
      %p330 = scmp.lt.s32.totalorder %s23, 1
      %s331 = scalar_select %p330, %s23, 1
      %s332 = smul.addr %s331, 2
      %s333 = smul.addr %s332, 8
      %s334 = scalar_lea.vmem %s0, %s333
      %p335 = pneg %p44
      %p336 = pneg %p41
      %p337 = scmp.lt.s32.totalorder %s23, 1
      %s338 = scalar_select %p337, %s23, 1
      %s339 = smul.addr %s338, 64
      %s340 = smul.addr %s339, 4
      %s341 = scalar_lea.vmem %s1, %s340
      %p342 = pneg %p70
      %p343 = pneg %p67
      %p344 = pneg %p91
      %p345 = pneg %p88
      %p346 = pneg %p112
      %p347 = pneg %p109
      %p348 = pneg %p133
      %p349 = pneg %p130
      %p350 = pneg %p154
      %p351 = pneg %p151
      %p352 = pneg %p175
      %p353 = pneg %p172
      %p354 = pneg %p196
      %p355 = pneg %p193
      %p356 = pneg %p217
      %p357 = pneg %p214
      %p358 = pneg %p238
      %p359 = pneg %p235
      %p360 = pneg %p264
      %p361 = pneg %p261
      %p362 = scmp.lt.s32.totalorder %s23, 1
      %s363 = scalar_select %p362, %s23, 1
      %s364 = scalar_lea.vmem %s10, %s363
      %p365 = scmp.lt.s32.totalorder %s23, 1
      %s366 = scalar_select %p365, %s23, 1
      %s367 = smul.addr %s366, 2
      %s368 = smul.addr %s367, 8
      %s369 = scalar_lea.vmem %s0, %s368
      %p370 = scmp.lt.s32.totalorder %s23, 1
      %s371 = scalar_select %p370, %s23, 1
      %s372 = smul.addr %s371, 64
      %s373 = smul.addr %s372, 4
      %s374 = scalar_lea.vmem %s1, %s373
      %p375 = scmp.lt.s32.totalorder %s23, 1
      %s376 = scalar_select %p375, %s23, 1
      %s377 = scalar_lea.vmem %s10, %s376
      %v378 = vld [vmem:[%s369] sm:$0xff]
      %v379 = vld [vmem:[%s369 + $0x8] sm:$0xff]
      %v380 = vld [vmem:[%s374] sm:$0xff]
      %v381 = vld [vmem:[%s374 + $0x8] sm:$0xff]
      %v382 = vld [vmem:[%s374 + $0x10] sm:$0xff]
      %v383 = vld [vmem:[%s374 + $0x18] sm:$0xff]
      %v384 = vld [vmem:[%s374 + $0x20] sm:$0xff]
      %v385 = vld [vmem:[%s374 + $0x28] sm:$0xff]
      %v386 = vld [vmem:[%s374 + $0x30] sm:$0xff]
      %v387 = vld [vmem:[%s374 + $0x38] sm:$0xff]
      %v388 = vld [vmem:[%s374 + $0x40] sm:$0xff]
      %v389 = vld [vmem:[%s374 + $0x48] sm:$0xff]
      %v390 = vld [vmem:[%s374 + $0x50] sm:$0xff]
      %v391 = vld [vmem:[%s374 + $0x58] sm:$0xff]
      %v392 = vld [vmem:[%s374 + $0x60] sm:$0xff]
      %v393 = vld [vmem:[%s374 + $0x68] sm:$0xff]
      %v394 = vld [vmem:[%s374 + $0x70] sm:$0xff]
      %v395 = vld [vmem:[%s374 + $0x78] sm:$0xff]
      %v396 = vld [vmem:[%s374 + $0x80] sm:$0xff]
      %v397 = vld [vmem:[%s374 + $0x88] sm:$0xff]
      %v398 = vld [vmem:[%s374 + $0x90] sm:$0xff]
      %v399 = vld [vmem:[%s374 + $0x98] sm:$0xff]
      %v400 = vld [vmem:[%s374 + $0xa0] sm:$0xff]
      %v401 = vld [vmem:[%s374 + $0xa8] sm:$0xff]
      %v402 = vld [vmem:[%s374 + $0xb0] sm:$0xff]
      %v403 = vld [vmem:[%s374 + $0xb8] sm:$0xff]
      %v404 = vld [vmem:[%s374 + $0xc0] sm:$0xff]
      %v405 = vld [vmem:[%s374 + $0xc8] sm:$0xff]
      %v406 = vld [vmem:[%s374 + $0xd0] sm:$0xff]
      %v407 = vld [vmem:[%s374 + $0xd8] sm:$0xff]
      %v408 = vld [vmem:[%s374 + $0xe0] sm:$0xff]
      %v409 = vld [vmem:[%s374 + $0xe8] sm:$0xff]
      %v410 = vld [vmem:[%s374 + $0xf0] sm:$0xff]
      %v411 = vld [vmem:[%s374 + $0xf8] sm:$0xff]
      %v412 = vunpack.c.l.bf16 %v380
      %v413 = vunpack.c.h.bf16 %v380
      %v414 = vunpack.c.l.bf16 %v381
      %v415 = vunpack.c.h.bf16 %v381
      %v416 = vunpack.c.l.bf16 %v382
      %v417 = vunpack.c.h.bf16 %v382
      %v418 = vunpack.c.l.bf16 %v383
      %v419 = vunpack.c.h.bf16 %v383
      %v420 = vunpack.c.l.bf16 %v384
      %v421 = vunpack.c.h.bf16 %v384
      %v422 = vunpack.c.l.bf16 %v385
      %v423 = vunpack.c.h.bf16 %v385
      %v424 = vunpack.c.l.bf16 %v386
      %v425 = vunpack.c.h.bf16 %v386
      %v426 = vunpack.c.l.bf16 %v387
      %v427 = vunpack.c.h.bf16 %v387
      %v428 = vunpack.c.l.bf16 %v388
      %v429 = vunpack.c.h.bf16 %v388
      %v430 = vunpack.c.l.bf16 %v389
      %v431 = vunpack.c.h.bf16 %v389
      %v432 = vunpack.c.l.bf16 %v390
      %v433 = vunpack.c.h.bf16 %v390
      %v434 = vunpack.c.l.bf16 %v391
      %v435 = vunpack.c.h.bf16 %v391
      %v436 = vunpack.c.l.bf16 %v392
      %v437 = vunpack.c.h.bf16 %v392
      %v438 = vunpack.c.l.bf16 %v393
      %v439 = vunpack.c.h.bf16 %v393
      %v440 = vunpack.c.l.bf16 %v394
      %v441 = vunpack.c.h.bf16 %v394
      %v442 = vunpack.c.l.bf16 %v395
      %v443 = vunpack.c.h.bf16 %v395
      %v444 = vunpack.c.l.bf16 %v396
      %v445 = vunpack.c.h.bf16 %v396
      %v446 = vunpack.c.l.bf16 %v397
      %v447 = vunpack.c.h.bf16 %v397
      %v448 = vunpack.c.l.bf16 %v398
      %v449 = vunpack.c.h.bf16 %v398
      %v450 = vunpack.c.l.bf16 %v399
      %v451 = vunpack.c.h.bf16 %v399
      %v452 = vunpack.c.l.bf16 %v400
      %v453 = vunpack.c.h.bf16 %v400
      %v454 = vunpack.c.l.bf16 %v401
      %v455 = vunpack.c.h.bf16 %v401
      %v456 = vunpack.c.l.bf16 %v402
      %v457 = vunpack.c.h.bf16 %v402
      %v458 = vunpack.c.l.bf16 %v403
      %v459 = vunpack.c.h.bf16 %v403
      %v460 = vunpack.c.l.bf16 %v404
      %v461 = vunpack.c.h.bf16 %v404
      %v462 = vunpack.c.l.bf16 %v405
      %v463 = vunpack.c.h.bf16 %v405
      %v464 = vunpack.c.l.bf16 %v406
      %v465 = vunpack.c.h.bf16 %v406
      %v466 = vunpack.c.l.bf16 %v407
      %v467 = vunpack.c.h.bf16 %v407
      %v468 = vunpack.c.l.bf16 %v408
      %v469 = vunpack.c.h.bf16 %v408
      %v470 = vunpack.c.l.bf16 %v409
      %v471 = vunpack.c.h.bf16 %v409
      %v472 = vunpack.c.l.bf16 %v410
      %v473 = vunpack.c.h.bf16 %v410
      %v474 = vunpack.c.l.bf16 %v411
      %v475 = vunpack.c.h.bf16 %v411
      %v476 = vld [vmem:[%s2] sm:$0xff]
      %v477 = vld [vmem:[%s2 + $0x8] sm:$0xff]
      %v478 = vld [vmem:[%s2 + $0x10] sm:$0xff]
      %v479 = vld [vmem:[%s2 + $0x18] sm:$0xff]
      %vm480 = vcmask 64512
      %v482 = vsel %vm480, %v476, 0
      %v485 = vsel %vm480, %v477, 0
      %v488 = vsel %vm480, %v478, 0
      %v491 = vsel %vm480, %v479, 0
      %493 = vmatprep.subr.mxu0 %v379
      %494 = vmatpush1.msra.mxu0 %v378
      %495 = vmatprep.subr.mxu0 0.0
      %496 = vmatpush1.msra.mxu0 0.0
      %497 = vmatprep.subr.mxu0 0.0
      %498 = vmatpush1.msra.mxu0 0.0
      %499 = vmatprep.subr.mxu0 0.0
      %500 = vmatpush1.msra.mxu0 0.0
      %501 = vmatprep.subr.mxu0 0.0
      %502 = vmatpush1.msra.mxu0 0.0
      %503 = vmatprep.subr.mxu0 0.0
      %504 = vmatpush1.msra.mxu0 0.0
      %505 = vmatprep.subr.mxu0 0.0
      %506 = vmatpush1.msra.mxu0 0.0
      %507 = vmatprep.subr.mxu0 0.0
      %508 = vmatpush1.msra.mxu0 0.0
      %509 = vmatprep.subr.mxu0 0.0
      %510 = vmatpush1.msra.mxu0 0.0
      %511 = vmatprep.subr.mxu0 0.0
      %512 = vmatpush1.msra.mxu0 0.0
      %513 = vmatprep.subr.mxu0 0.0
      %514 = vmatpush1.msra.mxu0 0.0
      %515 = vmatprep.subr.mxu0 0.0
      %516 = vmatpush1.msra.mxu0 0.0
      %517 = vmatprep.subr.mxu0 0.0
      %518 = vmatpush1.msra.mxu0 0.0
      %519 = vmatprep.subr.mxu0 0.0
      %520 = vmatpush1.msra.mxu0 0.0
      %521 = vmatprep.subr.mxu0 0.0
      %522 = vmatpush1.msra.mxu0 0.0
      %523 = vmatprep.subr.mxu0 0.0
      %524 = vmatpush1.msra.mxu0 0.0
      %525 = vmatprep.subr.mxu0 0.0
      %526 = vmatpush1.msra.mxu0 0.0
      %527 = vmatprep.subr.mxu0 0.0
      %528 = vmatpush1.msra.mxu0 0.0
      %529 = vmatprep.subr.mxu0 0.0
      %530 = vmatpush1.msra.mxu0 0.0
      %531 = vmatprep.subr.mxu0 0.0
      %532 = vmatpush1.msra.mxu0 0.0
      %533 = vmatprep.subr.mxu0 0.0
      %534 = vmatpush1.msra.mxu0 0.0
      %535 = vmatprep.subr.mxu0 0.0
      %536 = vmatpush1.msra.mxu0 0.0
      %537 = vmatprep.subr.mxu0 0.0
      %538 = vmatpush1.msra.mxu0 0.0
      %539 = vmatprep.subr.mxu0 0.0
      %540 = vmatpush1.msra.mxu0 0.0
      %541 = vmatprep.subr.mxu0 0.0
      %542 = vmatpush1.msra.mxu0 0.0
      %543 = vmatprep.subr.mxu0 0.0
      %544 = vmatpush1.msra.mxu0 0.0
      %545 = vmatprep.subr.mxu0 0.0
      %546 = vmatpush1.msra.mxu0 0.0
      %547 = vmatprep.subr.mxu0 0.0
      %548 = vmatpush1.msra.mxu0 0.0
      %549 = vmatprep.subr.mxu0 0.0
      %550 = vmatpush1.msra.mxu0 0.0
      %551 = vmatprep.subr.mxu0 0.0
      %552 = vmatpush1.msra.mxu0 0.0
      %553 = vmatprep.subr.mxu0 0.0
      %554 = vmatpush1.msra.mxu0 0.0
      %555 = vmatprep.subr.mxu0 0.0
      %556 = vmatpush1.msra.mxu0 0.0
      %557 = vmatprep.mubr.f32.mxu0 0.0
      %558 = vmatmul.mubr.f32.gmra.mrb[0].mxu0 %v482
      %v559 = vpop.f32.mrb[0].mxu0
      %v560 = vadd.f32 0.0, %v559
      %v561 = vpop.f32.mrb[0].mxu0
      %v562 = vadd.f32 0.0, %v561
      %563 = vmatprep.mubr.f32.mxu0 0.0
      %564 = vmatmul.mubr.f32.gmra.mrb[0].mxu0 %v485
      %v565 = vpop.f32.mrb[0].mxu0
      %v566 = vadd.f32 0.0, %v565
      %v567 = vpop.f32.mrb[0].mxu0
      %v568 = vadd.f32 0.0, %v567
      %569 = vmatprep.mubr.f32.mxu0 0.0
      %570 = vmatmul.mubr.f32.gmra.mrb[0].mxu0 %v488
      %v571 = vpop.f32.mrb[0].mxu0
      %v572 = vadd.f32 0.0, %v571
      %v573 = vpop.f32.mrb[0].mxu0
      %v574 = vadd.f32 0.0, %v573
      %575 = vmatprep.mubr.f32.mxu0 0.0
      %576 = vmatmul.mubr.f32.gmra.mrb[0].mxu0 %v491
      %v577 = vpop.f32.mrb[0].mxu0
      %v578 = vadd.f32 0.0, %v577
      %v579 = vpop.f32.mrb[0].mxu0
      %v580 = vadd.f32 0.0, %v579
      %581 = vdwg.mxu0
      %v582 = vld [vmem:[%s3] sm:$0xff]
      %v583 = vld [vmem:[%s3 + $0x8] sm:$0xff]
      %v584 = vld [vmem:[%s3 + $0x10] sm:$0xff]
      %v585 = vld [vmem:[%s3 + $0x18] sm:$0xff]
      %587 = vset.pattern.permute.xlu0 0
      %588 = vperm.xlu0 %587, %v582
      %v589 = vpop.permute.xlu0 %588
      %592 = vset.pattern.permute.xlu0 0
      %593 = vperm.xlu0 %592, %v583
      %v594 = vpop.permute.xlu0 %593
      %597 = vset.pattern.permute.xlu0 0
      %598 = vperm.xlu0 %597, %v584
      %v599 = vpop.permute.xlu0 %598
      %602 = vset.pattern.permute.xlu0 0
      %603 = vperm.xlu0 %602, %v585
      %v604 = vpop.permute.xlu0 %603
      %606 = vmatprep.subr.mxu0 %v413
      %607 = vmatpush1.msra.mxu0 %v412
      %608 = vmatprep.subr.mxu0 %v415
      %609 = vmatpush1.msra.mxu0 %v414
      %610 = vmatprep.subr.mxu0 %v417
      %611 = vmatpush1.msra.mxu0 %v416
      %612 = vmatprep.subr.mxu0 %v419
      %613 = vmatpush1.msra.mxu0 %v418
      %614 = vmatprep.subr.mxu0 %v421
      %615 = vmatpush1.msra.mxu0 %v420
      %616 = vmatprep.subr.mxu0 %v423
      %617 = vmatpush1.msra.mxu0 %v422
      %618 = vmatprep.subr.mxu0 %v425
      %619 = vmatpush1.msra.mxu0 %v424
      %620 = vmatprep.subr.mxu0 %v427
      %621 = vmatpush1.msra.mxu0 %v426
      %622 = vmatprep.subr.mxu0 %v429
      %623 = vmatpush1.msra.mxu0 %v428
      %624 = vmatprep.subr.mxu0 %v431
      %625 = vmatpush1.msra.mxu0 %v430
      %626 = vmatprep.subr.mxu0 %v433
      %627 = vmatpush1.msra.mxu0 %v432
      %628 = vmatprep.subr.mxu0 %v435
      %629 = vmatpush1.msra.mxu0 %v434
      %630 = vmatprep.subr.mxu0 %v437
      %631 = vmatpush1.msra.mxu0 %v436
      %632 = vmatprep.subr.mxu0 %v439
      %633 = vmatpush1.msra.mxu0 %v438
      %634 = vmatprep.subr.mxu0 %v441
      %635 = vmatpush1.msra.mxu0 %v440
      %636 = vmatprep.subr.mxu0 %v443
      %637 = vmatpush1.msra.mxu0 %v442
      %638 = vmatprep.subr.mxu0 %v445
      %639 = vmatpush1.msra.mxu0 %v444
      %640 = vmatprep.subr.mxu0 %v447
      %641 = vmatpush1.msra.mxu0 %v446
      %642 = vmatprep.subr.mxu0 %v449
      %643 = vmatpush1.msra.mxu0 %v448
      %644 = vmatprep.subr.mxu0 %v451
      %645 = vmatpush1.msra.mxu0 %v450
      %646 = vmatprep.subr.mxu0 %v453
      %647 = vmatpush1.msra.mxu0 %v452
      %648 = vmatprep.subr.mxu0 %v455
      %649 = vmatpush1.msra.mxu0 %v454
      %650 = vmatprep.subr.mxu0 %v457
      %651 = vmatpush1.msra.mxu0 %v456
      %652 = vmatprep.subr.mxu0 %v459
      %653 = vmatpush1.msra.mxu0 %v458
      %654 = vmatprep.subr.mxu0 %v461
      %655 = vmatpush1.msra.mxu0 %v460
      %656 = vmatprep.subr.mxu0 %v463
      %657 = vmatpush1.msra.mxu0 %v462
      %658 = vmatprep.subr.mxu0 %v465
      %659 = vmatpush1.msra.mxu0 %v464
      %660 = vmatprep.subr.mxu0 %v467
      %661 = vmatpush1.msra.mxu0 %v466
      %662 = vmatprep.subr.mxu0 %v469
      %663 = vmatpush1.msra.mxu0 %v468
      %664 = vmatprep.subr.mxu0 %v471
      %665 = vmatpush1.msra.mxu0 %v470
      %666 = vmatprep.subr.mxu0 %v473
      %667 = vmatpush1.msra.mxu0 %v472
      %668 = vmatprep.subr.mxu0 %v475
      %669 = vmatpush1.msra.mxu0 %v474
      %670 = vmatprep.mubr.f32.mxu0 %v562
      %671 = vmatmul.mubr.f32.gmra.mrb[0].mxu0 %v560
      %v672 = vpop.f32.mrb[0].mxu0
      %v673 = vadd.f32 %v589, %v672
      %v674 = vpop.f32.mrb[0].mxu0
      %v675 = vadd.f32 %v589, %v674
      %676 = vmatprep.mubr.f32.mxu0 %v568
      %677 = vmatmul.mubr.f32.gmra.mrb[0].mxu0 %v566
      %v678 = vpop.f32.mrb[0].mxu0
      %v679 = vadd.f32 %v594, %v678
      %v680 = vpop.f32.mrb[0].mxu0
      %v681 = vadd.f32 %v594, %v680
      %682 = vmatprep.mubr.f32.mxu0 %v574
      %683 = vmatmul.mubr.f32.gmra.mrb[0].mxu0 %v572
      %v684 = vpop.f32.mrb[0].mxu0
      %v685 = vadd.f32 %v599, %v684
      %v686 = vpop.f32.mrb[0].mxu0
      %v687 = vadd.f32 %v599, %v686
      %688 = vmatprep.mubr.f32.mxu0 %v580
      %689 = vmatmul.mubr.f32.gmra.mrb[0].mxu0 %v578
      %v690 = vpop.f32.mrb[0].mxu0
      %v691 = vadd.f32 %v604, %v690
      %v692 = vpop.f32.mrb[0].mxu0
      %v693 = vadd.f32 %v604, %v692
      %694 = vdwg.mxu0
      %v695 = vmax.f32 %v673, 0.0
      %v696 = vmax.f32 %v675, 0.0
      %v697 = vmax.f32 %v679, 0.0
      %v698 = vmax.f32 %v681, 0.0
      %v699 = vmax.f32 %v685, 0.0
      %v700 = vmax.f32 %v687, 0.0
      %v701 = vmax.f32 %v691, 0.0
      %v702 = vmax.f32 %v693, 0.0
      %v703 = vld [vmem:[%s4] sm:$0xf]
      %vm704 = vcmask 261120
      %v706 = vsel %vm704, %v703, 0
      %708 = vmatprep.subr.mxu0 %v696
      %709 = vmatpush1.msra.mxu0 %v695
      %710 = vmatprep.subr.mxu0 %v698
      %711 = vmatpush1.msra.mxu0 %v697
      %712 = vmatprep.subr.mxu0 %v700
      %713 = vmatpush1.msra.mxu0 %v699
      %714 = vmatprep.subr.mxu0 %v702
      %715 = vmatpush1.msra.mxu0 %v701
      %716 = vmatprep.subr.mxu0 0.0
      %717 = vmatpush1.msra.mxu0 0.0
      %718 = vmatprep.subr.mxu0 0.0
      %719 = vmatpush1.msra.mxu0 0.0
      %720 = vmatprep.subr.mxu0 0.0
      %721 = vmatpush1.msra.mxu0 0.0
      %722 = vmatprep.subr.mxu0 0.0
      %723 = vmatpush1.msra.mxu0 0.0
      %724 = vmatprep.subr.mxu0 0.0
      %725 = vmatpush1.msra.mxu0 0.0
      %726 = vmatprep.subr.mxu0 0.0
      %727 = vmatpush1.msra.mxu0 0.0
      %728 = vmatprep.subr.mxu0 0.0
      %729 = vmatpush1.msra.mxu0 0.0
      %730 = vmatprep.subr.mxu0 0.0
      %731 = vmatpush1.msra.mxu0 0.0
      %732 = vmatprep.subr.mxu0 0.0
      %733 = vmatpush1.msra.mxu0 0.0
      %734 = vmatprep.subr.mxu0 0.0
      %735 = vmatpush1.msra.mxu0 0.0
      %736 = vmatprep.subr.mxu0 0.0
      %737 = vmatpush1.msra.mxu0 0.0
      %738 = vmatprep.subr.mxu0 0.0
      %739 = vmatpush1.msra.mxu0 0.0
      %740 = vmatprep.subr.mxu0 0.0
      %741 = vmatpush1.msra.mxu0 0.0
      %742 = vmatprep.subr.mxu0 0.0
      %743 = vmatpush1.msra.mxu0 0.0
      %744 = vmatprep.subr.mxu0 0.0
      %745 = vmatpush1.msra.mxu0 0.0
      %746 = vmatprep.subr.mxu0 0.0
      %747 = vmatpush1.msra.mxu0 0.0
      %748 = vmatprep.subr.mxu0 0.0
      %749 = vmatpush1.msra.mxu0 0.0
      %750 = vmatprep.subr.mxu0 0.0
      %751 = vmatpush1.msra.mxu0 0.0
      %752 = vmatprep.subr.mxu0 0.0
      %753 = vmatpush1.msra.mxu0 0.0
      %754 = vmatprep.subr.mxu0 0.0
      %755 = vmatpush1.msra.mxu0 0.0
      %756 = vmatprep.subr.mxu0 0.0
      %757 = vmatpush1.msra.mxu0 0.0
      %758 = vmatprep.subr.mxu0 0.0
      %759 = vmatpush1.msra.mxu0 0.0
      %760 = vmatprep.subr.mxu0 0.0
      %761 = vmatpush1.msra.mxu0 0.0
      %762 = vmatprep.subr.mxu0 0.0
      %763 = vmatpush1.msra.mxu0 0.0
      %764 = vmatprep.subr.mxu0 0.0
      %765 = vmatpush1.msra.mxu0 0.0
      %766 = vmatprep.subr.mxu0 0.0
      %767 = vmatpush1.msra.mxu0 0.0
      %768 = vmatprep.subr.mxu0 0.0
      %769 = vmatpush1.msra.mxu0 0.0
      %770 = vmatprep.subr.mxu0 0.0
      %771 = vmatpush1.msra.mxu0 0.0
      %772 = vmatprep.mubr.f32.mxu0 0.0
      %773 = vmatmul.mubr.f32.gmra.mrb[0].mxu0 %v706
      %v774 = vpop.f32.mrb[0].mxu0
      %v775 = vadd.f32 0.0, %v774
      %v776 = vpop.f32.mrb[0].mxu0
      %v777 = vadd.f32 0.0, %v776
      %778 = vdwg.mxu0
      %v779 = vld [vmem:[%s5] sm:$0xf]
      %781 = vset.pattern.permute.xlu0 0
      %782 = vperm.xlu0 %781, %v779
      %v783 = vpop.permute.xlu0 %782
      %785 = vmatprep.subr.mxu0 %v413
      %786 = vmatpush1.msra.mxu0 %v412
      %787 = vmatprep.subr.mxu0 %v415
      %788 = vmatpush1.msra.mxu0 %v414
      %789 = vmatprep.subr.mxu0 %v417
      %790 = vmatpush1.msra.mxu0 %v416
      %791 = vmatprep.subr.mxu0 %v419
      %792 = vmatpush1.msra.mxu0 %v418
      %793 = vmatprep.subr.mxu0 %v421
      %794 = vmatpush1.msra.mxu0 %v420
      %795 = vmatprep.subr.mxu0 %v423
      %796 = vmatpush1.msra.mxu0 %v422
      %797 = vmatprep.subr.mxu0 %v425
      %798 = vmatpush1.msra.mxu0 %v424
      %799 = vmatprep.subr.mxu0 %v427
      %800 = vmatpush1.msra.mxu0 %v426
      %801 = vmatprep.subr.mxu0 %v429
      %802 = vmatpush1.msra.mxu0 %v428
      %803 = vmatprep.subr.mxu0 %v431
      %804 = vmatpush1.msra.mxu0 %v430
      %805 = vmatprep.subr.mxu0 %v433
      %806 = vmatpush1.msra.mxu0 %v432
      %807 = vmatprep.subr.mxu0 %v435
      %808 = vmatpush1.msra.mxu0 %v434
      %809 = vmatprep.subr.mxu0 %v437
      %810 = vmatpush1.msra.mxu0 %v436
      %811 = vmatprep.subr.mxu0 %v439
      %812 = vmatpush1.msra.mxu0 %v438
      %813 = vmatprep.subr.mxu0 %v441
      %814 = vmatpush1.msra.mxu0 %v440
      %815 = vmatprep.subr.mxu0 %v443
      %816 = vmatpush1.msra.mxu0 %v442
      %817 = vmatprep.subr.mxu0 %v445
      %818 = vmatpush1.msra.mxu0 %v444
      %819 = vmatprep.subr.mxu0 %v447
      %820 = vmatpush1.msra.mxu0 %v446
      %821 = vmatprep.subr.mxu0 %v449
      %822 = vmatpush1.msra.mxu0 %v448
      %823 = vmatprep.subr.mxu0 %v451
      %824 = vmatpush1.msra.mxu0 %v450
      %825 = vmatprep.subr.mxu0 %v453
      %826 = vmatpush1.msra.mxu0 %v452
      %827 = vmatprep.subr.mxu0 %v455
      %828 = vmatpush1.msra.mxu0 %v454
      %829 = vmatprep.subr.mxu0 %v457
      %830 = vmatpush1.msra.mxu0 %v456
      %831 = vmatprep.subr.mxu0 %v459
      %832 = vmatpush1.msra.mxu0 %v458
      %833 = vmatprep.subr.mxu0 %v461
      %834 = vmatpush1.msra.mxu0 %v460
      %835 = vmatprep.subr.mxu0 %v463
      %836 = vmatpush1.msra.mxu0 %v462
      %837 = vmatprep.subr.mxu0 %v465
      %838 = vmatpush1.msra.mxu0 %v464
      %839 = vmatprep.subr.mxu0 %v467
      %840 = vmatpush1.msra.mxu0 %v466
      %841 = vmatprep.subr.mxu0 %v469
      %842 = vmatpush1.msra.mxu0 %v468
      %843 = vmatprep.subr.mxu0 %v471
      %844 = vmatpush1.msra.mxu0 %v470
      %845 = vmatprep.subr.mxu0 %v473
      %846 = vmatpush1.msra.mxu0 %v472
      %847 = vmatprep.subr.mxu0 %v475
      %848 = vmatpush1.msra.mxu0 %v474
      %849 = vmatprep.mubr.f32.mxu0 %v777
      %850 = vmatmul.mubr.f32.gmra.mrb[0].mxu0 %v775
      %v851 = vpop.f32.mrb[0].mxu0
      %v852 = vadd.f32 %v783, %v851
      %v853 = vpop.f32.mrb[0].mxu0
      %v854 = vadd.f32 %v783, %v853
      %855 = vdwg.mxu0
      %v856 = vmax.f32 %v852, 0.0
      %v857 = vmax.f32 %v854, 0.0
      %v858 = vld [vmem:[%s7] sm:$0x1]
      %v859 = vld [vmem:[%s6] sm:$0xff]
      %v860 = vld [vmem:[%s6 + $0x8] sm:$0xff]
      %v861 = vld [vmem:[%s6 + $0x10] sm:$0xff]
      %v862 = vld [vmem:[%s6 + $0x18] sm:$0xff]
      %v863 = vld [vmem:[%s6 + $0x20] sm:$0xff]
      %v864 = vld [vmem:[%s6 + $0x28] sm:$0xff]
      %v865 = vld [vmem:[%s6 + $0x30] sm:$0xff]
      %v866 = vld [vmem:[%s6 + $0x38] sm:$0xff]
      %v867 = vld [vmem:[%s6 + $0x40] sm:$0xff]
      %v868 = vld [vmem:[%s6 + $0x48] sm:$0xff]
      %v869 = vld [vmem:[%s6 + $0x50] sm:$0xff]
      %v870 = vld [vmem:[%s6 + $0x58] sm:$0xff]
      %v871 = vld [vmem:[%s6 + $0x60] sm:$0xff]
      %v872 = vld [vmem:[%s6 + $0x68] sm:$0xff]
      %v873 = vld [vmem:[%s6 + $0x70] sm:$0xff]
      %v874 = vld [vmem:[%s6 + $0x78] sm:$0xff]
      %v875 = vld [vmem:[%s6 + $0x80] sm:$0xff]
      %v876 = vld [vmem:[%s6 + $0x88] sm:$0xff]
      %v877 = vld [vmem:[%s6 + $0x90] sm:$0xff]
      %v878 = vld [vmem:[%s6 + $0x98] sm:$0xff]
      %v879 = vld [vmem:[%s6 + $0xa0] sm:$0xff]
      %v880 = vld [vmem:[%s6 + $0xa8] sm:$0xff]
      %v881 = vld [vmem:[%s6 + $0xb0] sm:$0xff]
      %v882 = vld [vmem:[%s6 + $0xb8] sm:$0xff]
      %v883 = vld [vmem:[%s6 + $0xc0] sm:$0xff]
      %v884 = vld [vmem:[%s6 + $0xc8] sm:$0xff]
      %v885 = vld [vmem:[%s6 + $0xd0] sm:$0xff]
      %v886 = vld [vmem:[%s6 + $0xd8] sm:$0xff]
      %v887 = vld [vmem:[%s6 + $0xe0] sm:$0xff]
      %v888 = vld [vmem:[%s6 + $0xe8] sm:$0xff]
      %v889 = vld [vmem:[%s6 + $0xf0] sm:$0xff]
      %v890 = vld [vmem:[%s6 + $0xf8] sm:$0xff]
      %891 = vmatprep.subr.mxu0 0.0
      %892 = vmatpush1.msra.mxu0 %v859
      %893 = vmatprep.subr.mxu0 0.0
      %894 = vmatpush1.msra.mxu0 %v860
      %895 = vmatprep.subr.mxu0 0.0
      %896 = vmatpush1.msra.mxu0 %v861
      %897 = vmatprep.subr.mxu0 0.0
      %898 = vmatpush1.msra.mxu0 %v862
      %899 = vmatprep.subr.mxu0 0.0
      %900 = vmatpush1.msra.mxu0 %v863
      %901 = vmatprep.subr.mxu0 0.0
      %902 = vmatpush1.msra.mxu0 %v864
      %903 = vmatprep.subr.mxu0 0.0
      %904 = vmatpush1.msra.mxu0 %v865
      %905 = vmatprep.subr.mxu0 0.0
      %906 = vmatpush1.msra.mxu0 %v866
      %907 = vmatprep.subr.mxu0 0.0
      %908 = vmatpush1.msra.mxu0 %v867
      %909 = vmatprep.subr.mxu0 0.0
      %910 = vmatpush1.msra.mxu0 %v868
      %911 = vmatprep.subr.mxu0 0.0
      %912 = vmatpush1.msra.mxu0 %v869
      %913 = vmatprep.subr.mxu0 0.0
      %914 = vmatpush1.msra.mxu0 %v870
      %915 = vmatprep.subr.mxu0 0.0
      %916 = vmatpush1.msra.mxu0 %v871
      %917 = vmatprep.subr.mxu0 0.0
      %918 = vmatpush1.msra.mxu0 %v872
      %919 = vmatprep.subr.mxu0 0.0
      %920 = vmatpush1.msra.mxu0 %v873
      %921 = vmatprep.subr.mxu0 0.0
      %922 = vmatpush1.msra.mxu0 %v874
      %923 = vmatprep.subr.mxu0 0.0
      %924 = vmatpush1.msra.mxu0 %v875
      %925 = vmatprep.subr.mxu0 0.0
      %926 = vmatpush1.msra.mxu0 %v876
      %927 = vmatprep.subr.mxu0 0.0
      %928 = vmatpush1.msra.mxu0 %v877
      %929 = vmatprep.subr.mxu0 0.0
      %930 = vmatpush1.msra.mxu0 %v878
      %931 = vmatprep.subr.mxu0 0.0
      %932 = vmatpush1.msra.mxu0 %v879
      %933 = vmatprep.subr.mxu0 0.0
      %934 = vmatpush1.msra.mxu0 %v880
      %935 = vmatprep.subr.mxu0 0.0
      %936 = vmatpush1.msra.mxu0 %v881
      %937 = vmatprep.subr.mxu0 0.0
      %938 = vmatpush1.msra.mxu0 %v882
      %939 = vmatprep.subr.mxu0 0.0
      %940 = vmatpush1.msra.mxu0 %v883
      %941 = vmatprep.subr.mxu0 0.0
      %942 = vmatpush1.msra.mxu0 %v884
      %943 = vmatprep.subr.mxu0 0.0
      %944 = vmatpush1.msra.mxu0 %v885
      %945 = vmatprep.subr.mxu0 0.0
      %946 = vmatpush1.msra.mxu0 %v886
      %947 = vmatprep.subr.mxu0 0.0
      %948 = vmatpush1.msra.mxu0 %v887
      %949 = vmatprep.subr.mxu0 0.0
      %950 = vmatpush1.msra.mxu0 %v888
      %951 = vmatprep.subr.mxu0 0.0
      %952 = vmatpush1.msra.mxu0 %v889
      %953 = vmatprep.subr.mxu0 0.0
      %954 = vmatpush1.msra.mxu0 %v890
      %955 = vmatprep.mubr.f32.mxu0 %v857
      %956 = vmatmul.mubr.f32.gmra.mrb[0].mxu0 %v856
      %v957 = vpop.f32.mrb[0].mxu0
      %v958 = vadd.f32 0.0, %v957
      %v959 = vpop.f32.mrb[0].mxu0
      %960 = vdwg.mxu0
      %v961 = vadd.f32 %v858, %v958
      %s962 = scalar_lea.vmem %s6, 256
      %v963 = vld [vmem:[%s962] sm:$0xff]
      %v964 = vld [vmem:[%s962 + $0x8] sm:$0xff]
      %v965 = vld [vmem:[%s962 + $0x10] sm:$0xff]
      %v966 = vld [vmem:[%s962 + $0x18] sm:$0xff]
      %v967 = vld [vmem:[%s962 + $0x20] sm:$0xff]
      %v968 = vld [vmem:[%s962 + $0x28] sm:$0xff]
      %v969 = vld [vmem:[%s962 + $0x30] sm:$0xff]
      %v970 = vld [vmem:[%s962 + $0x38] sm:$0xff]
      %v971 = vld [vmem:[%s962 + $0x40] sm:$0xff]
      %v972 = vld [vmem:[%s962 + $0x48] sm:$0xff]
      %v973 = vld [vmem:[%s962 + $0x50] sm:$0xff]
      %v974 = vld [vmem:[%s962 + $0x58] sm:$0xff]
      %v975 = vld [vmem:[%s962 + $0x60] sm:$0xff]
      %v976 = vld [vmem:[%s962 + $0x68] sm:$0xff]
      %v977 = vld [vmem:[%s962 + $0x70] sm:$0xff]
      %v978 = vld [vmem:[%s962 + $0x78] sm:$0xff]
      %v979 = vld [vmem:[%s962 + $0x80] sm:$0xff]
      %v980 = vld [vmem:[%s962 + $0x88] sm:$0xff]
      %v981 = vld [vmem:[%s962 + $0x90] sm:$0xff]
      %v982 = vld [vmem:[%s962 + $0x98] sm:$0xff]
      %v983 = vld [vmem:[%s962 + $0xa0] sm:$0xff]
      %v984 = vld [vmem:[%s962 + $0xa8] sm:$0xff]
      %v985 = vld [vmem:[%s962 + $0xb0] sm:$0xff]
      %v986 = vld [vmem:[%s962 + $0xb8] sm:$0xff]
      %v987 = vld [vmem:[%s962 + $0xc0] sm:$0xff]
      %v988 = vld [vmem:[%s962 + $0xc8] sm:$0xff]
      %v989 = vld [vmem:[%s962 + $0xd0] sm:$0xff]
      %v990 = vld [vmem:[%s962 + $0xd8] sm:$0xff]
      %v991 = vld [vmem:[%s962 + $0xe0] sm:$0xff]
      %v992 = vld [vmem:[%s962 + $0xe8] sm:$0xff]
      %v993 = vld [vmem:[%s962 + $0xf0] sm:$0xff]
      %v994 = vld [vmem:[%s962 + $0xf8] sm:$0xff]
      %v997 = vrot.slane %v856, 1
      %v998 = vrot.slane %v857, 1
      %1001 = vmatprep.subr.mxu0 0.0
      %1002 = vmatpush1.msra.mxu0 %v963
      %1003 = vmatprep.subr.mxu0 0.0
      %1004 = vmatpush1.msra.mxu0 %v964
      %1005 = vmatprep.subr.mxu0 0.0
      %1006 = vmatpush1.msra.mxu0 %v965
      %1007 = vmatprep.subr.mxu0 0.0
      %1008 = vmatpush1.msra.mxu0 %v966
      %1009 = vmatprep.subr.mxu0 0.0
      %1010 = vmatpush1.msra.mxu0 %v967
      %1011 = vmatprep.subr.mxu0 0.0
      %1012 = vmatpush1.msra.mxu0 %v968
      %1013 = vmatprep.subr.mxu0 0.0
      %1014 = vmatpush1.msra.mxu0 %v969
      %1015 = vmatprep.subr.mxu0 0.0
      %1016 = vmatpush1.msra.mxu0 %v970
      %1017 = vmatprep.subr.mxu0 0.0
      %1018 = vmatpush1.msra.mxu0 %v971
      %1019 = vmatprep.subr.mxu0 0.0
      %1020 = vmatpush1.msra.mxu0 %v972
      %1021 = vmatprep.subr.mxu0 0.0
      %1022 = vmatpush1.msra.mxu0 %v973
      %1023 = vmatprep.subr.mxu0 0.0
      %1024 = vmatpush1.msra.mxu0 %v974
      %1025 = vmatprep.subr.mxu0 0.0
      %1026 = vmatpush1.msra.mxu0 %v975
      %1027 = vmatprep.subr.mxu0 0.0
      %1028 = vmatpush1.msra.mxu0 %v976
      %1029 = vmatprep.subr.mxu0 0.0
      %1030 = vmatpush1.msra.mxu0 %v977
      %1031 = vmatprep.subr.mxu0 0.0
      %1032 = vmatpush1.msra.mxu0 %v978
      %1033 = vmatprep.subr.mxu0 0.0
      %1034 = vmatpush1.msra.mxu0 %v979
      %1035 = vmatprep.subr.mxu0 0.0
      %1036 = vmatpush1.msra.mxu0 %v980
      %1037 = vmatprep.subr.mxu0 0.0
      %1038 = vmatpush1.msra.mxu0 %v981
      %1039 = vmatprep.subr.mxu0 0.0
      %1040 = vmatpush1.msra.mxu0 %v982
      %1041 = vmatprep.subr.mxu0 0.0
      %1042 = vmatpush1.msra.mxu0 %v983
      %1043 = vmatprep.subr.mxu0 0.0
      %1044 = vmatpush1.msra.mxu0 %v984
      %1045 = vmatprep.subr.mxu0 0.0
      %1046 = vmatpush1.msra.mxu0 %v985
      %1047 = vmatprep.subr.mxu0 0.0
      %1048 = vmatpush1.msra.mxu0 %v986
      %1049 = vmatprep.subr.mxu0 0.0
      %1050 = vmatpush1.msra.mxu0 %v987
      %1051 = vmatprep.subr.mxu0 0.0
      %1052 = vmatpush1.msra.mxu0 %v988
      %1053 = vmatprep.subr.mxu0 0.0
      %1054 = vmatpush1.msra.mxu0 %v989
      %1055 = vmatprep.subr.mxu0 0.0
      %1056 = vmatpush1.msra.mxu0 %v990
      %1057 = vmatprep.subr.mxu0 0.0
      %1058 = vmatpush1.msra.mxu0 %v991
      %1059 = vmatprep.subr.mxu0 0.0
      %1060 = vmatpush1.msra.mxu0 %v992
      %1061 = vmatprep.subr.mxu0 0.0
      %1062 = vmatpush1.msra.mxu0 %v993
      %1063 = vmatprep.subr.mxu0 0.0
      %1064 = vmatpush1.msra.mxu0 %v994
      %1065 = vmatprep.mubr.f32.mxu0 %v998
      %1066 = vmatmul.mubr.f32.gmra.mrb[0].mxu0 %v997
      %v1067 = vpop.f32.mrb[0].mxu0
      %v1068 = vadd.f32 0.0, %v1067
      %v1069 = vpop.f32.mrb[0].mxu0
      %1070 = vdwg.mxu0
      %v1071 = vadd.f32 %v961, %v1068
      %s1072 = scalar_lea.vmem %s6, 512
      %v1073 = vld [vmem:[%s1072] sm:$0xff]
      %v1074 = vld [vmem:[%s1072 + $0x8] sm:$0xff]
      %v1075 = vld [vmem:[%s1072 + $0x10] sm:$0xff]
      %v1076 = vld [vmem:[%s1072 + $0x18] sm:$0xff]
      %v1077 = vld [vmem:[%s1072 + $0x20] sm:$0xff]
      %v1078 = vld [vmem:[%s1072 + $0x28] sm:$0xff]
      %v1079 = vld [vmem:[%s1072 + $0x30] sm:$0xff]
      %v1080 = vld [vmem:[%s1072 + $0x38] sm:$0xff]
      %v1081 = vld [vmem:[%s1072 + $0x40] sm:$0xff]
      %v1082 = vld [vmem:[%s1072 + $0x48] sm:$0xff]
      %v1083 = vld [vmem:[%s1072 + $0x50] sm:$0xff]
      %v1084 = vld [vmem:[%s1072 + $0x58] sm:$0xff]
      %v1085 = vld [vmem:[%s1072 + $0x60] sm:$0xff]
      %v1086 = vld [vmem:[%s1072 + $0x68] sm:$0xff]
      %v1087 = vld [vmem:[%s1072 + $0x70] sm:$0xff]
      %v1088 = vld [vmem:[%s1072 + $0x78] sm:$0xff]
      %v1089 = vld [vmem:[%s1072 + $0x80] sm:$0xff]
      %v1090 = vld [vmem:[%s1072 + $0x88] sm:$0xff]
      %v1091 = vld [vmem:[%s1072 + $0x90] sm:$0xff]
      %v1092 = vld [vmem:[%s1072 + $0x98] sm:$0xff]
      %v1093 = vld [vmem:[%s1072 + $0xa0] sm:$0xff]
      %v1094 = vld [vmem:[%s1072 + $0xa8] sm:$0xff]
      %v1095 = vld [vmem:[%s1072 + $0xb0] sm:$0xff]
      %v1096 = vld [vmem:[%s1072 + $0xb8] sm:$0xff]
      %v1097 = vld [vmem:[%s1072 + $0xc0] sm:$0xff]
      %v1098 = vld [vmem:[%s1072 + $0xc8] sm:$0xff]
      %v1099 = vld [vmem:[%s1072 + $0xd0] sm:$0xff]
      %v1100 = vld [vmem:[%s1072 + $0xd8] sm:$0xff]
      %v1101 = vld [vmem:[%s1072 + $0xe0] sm:$0xff]
      %v1102 = vld [vmem:[%s1072 + $0xe8] sm:$0xff]
      %v1103 = vld [vmem:[%s1072 + $0xf0] sm:$0xff]
      %v1104 = vld [vmem:[%s1072 + $0xf8] sm:$0xff]
      %v1105 = vrot.slane %v856, 2
      %v1106 = vrot.slane %v857, 2
      %1109 = vmatprep.subr.mxu0 0.0
      %1110 = vmatpush1.msra.mxu0 %v1073
      %1111 = vmatprep.subr.mxu0 0.0
      %1112 = vmatpush1.msra.mxu0 %v1074
      %1113 = vmatprep.subr.mxu0 0.0
      %1114 = vmatpush1.msra.mxu0 %v1075
      %1115 = vmatprep.subr.mxu0 0.0
      %1116 = vmatpush1.msra.mxu0 %v1076
      %1117 = vmatprep.subr.mxu0 0.0
      %1118 = vmatpush1.msra.mxu0 %v1077
      %1119 = vmatprep.subr.mxu0 0.0
      %1120 = vmatpush1.msra.mxu0 %v1078
      %1121 = vmatprep.subr.mxu0 0.0
      %1122 = vmatpush1.msra.mxu0 %v1079
      %1123 = vmatprep.subr.mxu0 0.0
      %1124 = vmatpush1.msra.mxu0 %v1080
      %1125 = vmatprep.subr.mxu0 0.0
      %1126 = vmatpush1.msra.mxu0 %v1081
      %1127 = vmatprep.subr.mxu0 0.0
      %1128 = vmatpush1.msra.mxu0 %v1082
      %1129 = vmatprep.subr.mxu0 0.0
      %1130 = vmatpush1.msra.mxu0 %v1083
      %1131 = vmatprep.subr.mxu0 0.0
      %1132 = vmatpush1.msra.mxu0 %v1084
      %1133 = vmatprep.subr.mxu0 0.0
      %1134 = vmatpush1.msra.mxu0 %v1085
      %1135 = vmatprep.subr.mxu0 0.0
      %1136 = vmatpush1.msra.mxu0 %v1086
      %1137 = vmatprep.subr.mxu0 0.0
      %1138 = vmatpush1.msra.mxu0 %v1087
      %1139 = vmatprep.subr.mxu0 0.0
      %1140 = vmatpush1.msra.mxu0 %v1088
      %1141 = vmatprep.subr.mxu0 0.0
      %1142 = vmatpush1.msra.mxu0 %v1089
      %1143 = vmatprep.subr.mxu0 0.0
      %1144 = vmatpush1.msra.mxu0 %v1090
      %1145 = vmatprep.subr.mxu0 0.0
      %1146 = vmatpush1.msra.mxu0 %v1091
      %1147 = vmatprep.subr.mxu0 0.0
      %1148 = vmatpush1.msra.mxu0 %v1092
      %1149 = vmatprep.subr.mxu0 0.0
      %1150 = vmatpush1.msra.mxu0 %v1093
      %1151 = vmatprep.subr.mxu0 0.0
      %1152 = vmatpush1.msra.mxu0 %v1094
      %1153 = vmatprep.subr.mxu0 0.0
      %1154 = vmatpush1.msra.mxu0 %v1095
      %1155 = vmatprep.subr.mxu0 0.0
      %1156 = vmatpush1.msra.mxu0 %v1096
      %1157 = vmatprep.subr.mxu0 0.0
      %1158 = vmatpush1.msra.mxu0 %v1097
      %1159 = vmatprep.subr.mxu0 0.0
      %1160 = vmatpush1.msra.mxu0 %v1098
      %1161 = vmatprep.subr.mxu0 0.0
      %1162 = vmatpush1.msra.mxu0 %v1099
      %1163 = vmatprep.subr.mxu0 0.0
      %1164 = vmatpush1.msra.mxu0 %v1100
      %1165 = vmatprep.subr.mxu0 0.0
      %1166 = vmatpush1.msra.mxu0 %v1101
      %1167 = vmatprep.subr.mxu0 0.0
      %1168 = vmatpush1.msra.mxu0 %v1102
      %1169 = vmatprep.subr.mxu0 0.0
      %1170 = vmatpush1.msra.mxu0 %v1103
      %1171 = vmatprep.subr.mxu0 0.0
      %1172 = vmatpush1.msra.mxu0 %v1104
      %1173 = vmatprep.mubr.f32.mxu0 %v1106
      %1174 = vmatmul.mubr.f32.gmra.mrb[0].mxu0 %v1105
      %v1175 = vpop.f32.mrb[0].mxu0
      %v1176 = vadd.f32 0.0, %v1175
      %v1177 = vpop.f32.mrb[0].mxu0
      %1178 = vdwg.mxu0
      %v1179 = vadd.f32 %v1071, %v1176
      %s1180 = scalar_lea.vmem %s6, 768
      %v1181 = vld [vmem:[%s1180] sm:$0xff]
      %v1182 = vld [vmem:[%s1180 + $0x8] sm:$0xff]
      %v1183 = vld [vmem:[%s1180 + $0x10] sm:$0xff]
      %v1184 = vld [vmem:[%s1180 + $0x18] sm:$0xff]
      %v1185 = vld [vmem:[%s1180 + $0x20] sm:$0xff]
      %v1186 = vld [vmem:[%s1180 + $0x28] sm:$0xff]
      %v1187 = vld [vmem:[%s1180 + $0x30] sm:$0xff]
      %v1188 = vld [vmem:[%s1180 + $0x38] sm:$0xff]
      %v1189 = vld [vmem:[%s1180 + $0x40] sm:$0xff]
      %v1190 = vld [vmem:[%s1180 + $0x48] sm:$0xff]
      %v1191 = vld [vmem:[%s1180 + $0x50] sm:$0xff]
      %v1192 = vld [vmem:[%s1180 + $0x58] sm:$0xff]
      %v1193 = vld [vmem:[%s1180 + $0x60] sm:$0xff]
      %v1194 = vld [vmem:[%s1180 + $0x68] sm:$0xff]
      %v1195 = vld [vmem:[%s1180 + $0x70] sm:$0xff]
      %v1196 = vld [vmem:[%s1180 + $0x78] sm:$0xff]
      %v1197 = vld [vmem:[%s1180 + $0x80] sm:$0xff]
      %v1198 = vld [vmem:[%s1180 + $0x88] sm:$0xff]
      %v1199 = vld [vmem:[%s1180 + $0x90] sm:$0xff]
      %v1200 = vld [vmem:[%s1180 + $0x98] sm:$0xff]
      %v1201 = vld [vmem:[%s1180 + $0xa0] sm:$0xff]
      %v1202 = vld [vmem:[%s1180 + $0xa8] sm:$0xff]
      %v1203 = vld [vmem:[%s1180 + $0xb0] sm:$0xff]
      %v1204 = vld [vmem:[%s1180 + $0xb8] sm:$0xff]
      %v1205 = vld [vmem:[%s1180 + $0xc0] sm:$0xff]
      %v1206 = vld [vmem:[%s1180 + $0xc8] sm:$0xff]
      %v1207 = vld [vmem:[%s1180 + $0xd0] sm:$0xff]
      %v1208 = vld [vmem:[%s1180 + $0xd8] sm:$0xff]
      %v1209 = vld [vmem:[%s1180 + $0xe0] sm:$0xff]
      %v1210 = vld [vmem:[%s1180 + $0xe8] sm:$0xff]
      %v1211 = vld [vmem:[%s1180 + $0xf0] sm:$0xff]
      %v1212 = vld [vmem:[%s1180 + $0xf8] sm:$0xff]
      %v1213 = vrot.slane %v856, 3
      %v1214 = vrot.slane %v857, 3
      %1217 = vmatprep.subr.mxu0 0.0
      %1218 = vmatpush1.msra.mxu0 %v1181
      %1219 = vmatprep.subr.mxu0 0.0
      %1220 = vmatpush1.msra.mxu0 %v1182
      %1221 = vmatprep.subr.mxu0 0.0
      %1222 = vmatpush1.msra.mxu0 %v1183
      %1223 = vmatprep.subr.mxu0 0.0
      %1224 = vmatpush1.msra.mxu0 %v1184
      %1225 = vmatprep.subr.mxu0 0.0
      %1226 = vmatpush1.msra.mxu0 %v1185
      %1227 = vmatprep.subr.mxu0 0.0
      %1228 = vmatpush1.msra.mxu0 %v1186
      %1229 = vmatprep.subr.mxu0 0.0
      %1230 = vmatpush1.msra.mxu0 %v1187
      %1231 = vmatprep.subr.mxu0 0.0
      %1232 = vmatpush1.msra.mxu0 %v1188
      %1233 = vmatprep.subr.mxu0 0.0
      %1234 = vmatpush1.msra.mxu0 %v1189
      %1235 = vmatprep.subr.mxu0 0.0
      %1236 = vmatpush1.msra.mxu0 %v1190
      %1237 = vmatprep.subr.mxu0 0.0
      %1238 = vmatpush1.msra.mxu0 %v1191
      %1239 = vmatprep.subr.mxu0 0.0
      %1240 = vmatpush1.msra.mxu0 %v1192
      %1241 = vmatprep.subr.mxu0 0.0
      %1242 = vmatpush1.msra.mxu0 %v1193
      %1243 = vmatprep.subr.mxu0 0.0
      %1244 = vmatpush1.msra.mxu0 %v1194
      %1245 = vmatprep.subr.mxu0 0.0
      %1246 = vmatpush1.msra.mxu0 %v1195
      %1247 = vmatprep.subr.mxu0 0.0
      %1248 = vmatpush1.msra.mxu0 %v1196
      %1249 = vmatprep.subr.mxu0 0.0
      %1250 = vmatpush1.msra.mxu0 %v1197
      %1251 = vmatprep.subr.mxu0 0.0
      %1252 = vmatpush1.msra.mxu0 %v1198
      %1253 = vmatprep.subr.mxu0 0.0
      %1254 = vmatpush1.msra.mxu0 %v1199
      %1255 = vmatprep.subr.mxu0 0.0
      %1256 = vmatpush1.msra.mxu0 %v1200
      %1257 = vmatprep.subr.mxu0 0.0
      %1258 = vmatpush1.msra.mxu0 %v1201
      %1259 = vmatprep.subr.mxu0 0.0
      %1260 = vmatpush1.msra.mxu0 %v1202
      %1261 = vmatprep.subr.mxu0 0.0
      %1262 = vmatpush1.msra.mxu0 %v1203
      %1263 = vmatprep.subr.mxu0 0.0
      %1264 = vmatpush1.msra.mxu0 %v1204
      %1265 = vmatprep.subr.mxu0 0.0
      %1266 = vmatpush1.msra.mxu0 %v1205
      %1267 = vmatprep.subr.mxu0 0.0
      %1268 = vmatpush1.msra.mxu0 %v1206
      %1269 = vmatprep.subr.mxu0 0.0
      %1270 = vmatpush1.msra.mxu0 %v1207
      %1271 = vmatprep.subr.mxu0 0.0
      %1272 = vmatpush1.msra.mxu0 %v1208
      %1273 = vmatprep.subr.mxu0 0.0
      %1274 = vmatpush1.msra.mxu0 %v1209
      %1275 = vmatprep.subr.mxu0 0.0
      %1276 = vmatpush1.msra.mxu0 %v1210
      %1277 = vmatprep.subr.mxu0 0.0
      %1278 = vmatpush1.msra.mxu0 %v1211
      %1279 = vmatprep.subr.mxu0 0.0
      %1280 = vmatpush1.msra.mxu0 %v1212
      %1281 = vmatprep.mubr.f32.mxu0 %v1214
      %1282 = vmatmul.mubr.f32.gmra.mrb[0].mxu0 %v1213
      %v1283 = vpop.f32.mrb[0].mxu0
      %v1284 = vadd.f32 0.0, %v1283
      %v1285 = vpop.f32.mrb[0].mxu0
      %1286 = vdwg.mxu0
      %v1287 = vadd.f32 %v1179, %v1284
      %v1288 = vmax.f32 %v1287, 0.0
      %v1289 = vld [vmem:[%s8] sm:$0x1]
      %v1290 = vmul.f32 %v1288, %v1289
      %vm1291 = vcmask 483328
      %v1292 = vsel %vm1291, %v1290, 0.0
      %1293 = vadd.xlane.f32.xlu0 %v1292
      %v1294 = vpop.xlane.xlu0 %1293
      %v1295 = vld [vmem:[#allocation2] sm:$0x1]
      %v1296 = vadd.f32 %v1294, %v1295
      %v1297 = vsub.f32 0.0, %v1296
      %v1298 = vmul.f32 %v1297, 1.442695
      %v1299 = vpow.pop %v1298
      %v1300 = vadd.f32 %v1299, 1.0
      %v1301 = vrcp.pop %v1300
      %vm1302 = vcmask 0
      %1303 = vst.msk [vmem:[%s377] sm:$0x1] %vm1302, %v1301
      %p1304 = scmp.lt.s32.totalorder %s23, 1
      %s1305 = scalar_select %p1304, %s23, 1
      %s1306 = scalar_lea.vmem %s10, %s1305
      // Predicated region
      $region61: #{gcn_forward.1} parent=59 // pred_check
        %p1307 = pneg %p261
      $region62: #{gcn_forward.1} parent=59 // pred_check_branch
        %1309 = sbr.rel (%p1307) target = $region64
      $region63: #{gcn_forward.1} parent=59 // pred_region
        _
      $region64: #{gcn_forward.1} parent=59 // pred_fallthru
        _
    $region60: #{gcn_forward.1} parent=5 // pred_fallthru
      _
    %p1310 = scmp.le.s32.totalorder 2, %s18
    // Predicated region
    $region65: #{gcn_forward.1} parent=5 // pred_check
      %p1311 = pneg %p1310
    $region66: #{gcn_forward.1} parent=5 // pred_check_branch
      %1313 = sbr.rel (%p1311) target = $region68
    $region67: #{gcn_forward.1} parent=5 // pred_region
      %s1314 = ssub.s32 %s18, 2
      // Predicated region
      $region69: #{gcn_forward.1} parent=67 // pred_check
        %p1315 = pneg %p267
      $region70: #{gcn_forward.1} parent=67 // pred_check_branch
        %1317 = sbr.rel (%p1315) target = $region72
      $region71: #{gcn_forward.1} parent=67 // pred_region
        %p1318 = scmp.lt.s32.totalorder %s24, 1
        %s1319 = scalar_select %p1318, %s24, 1
        %s1320 = scalar_lea.vmem %s10, %s1319
      $region72: #{gcn_forward.1} parent=67 // pred_fallthru
        _
    $region68: #{gcn_forward.1} parent=5 // pred_fallthru
      _
  $region6: #{gcn_forward.1} parent=0 // loop_footer
    %s22 = sadd.s32 1, %s18
  $region7: #{gcn_forward.1} parent=0 // loop_footer_branch
    %17 = sbr.rel target = $region3
  $region8: #{gcn_forward.1} parent=0 // loop_exit
    _

</llo_original>
